<compile_context>
chip_gen: v7x
topology: tpu7x:2x2x1
jax: 0.10.0
libtpu: 0.0.40
codegen_flags: <defaults>
</compile_context>

<pallas_src>
import functools

import jax
import jax.numpy as jnp
import numpy as np
from jax.experimental import pallas as pl
from jax.experimental.pallas import tpu as pltpu

_INV_SQRT2 = 0.7071067811865476
_ERF_P = 0.3275911
_ERF_A = (0.254829592, -0.284496736, 1.421413741, -1.453152027, 1.061405429)


def _gelu(x):
    """Exact (erf-based) GELU matching torch F.gelu, via A&S 7.1.26.

    The polynomial's 1/(1 + p|z|) uses the EUP approximate reciprocal plus one
    Newton step: the divide leaves the (binding) VALU slot, accuracy ~f32.
    """
    a1, a2, a3, a4, a5 = _ERF_A
    z = x * _INV_SQRT2
    az = jnp.abs(z)
    d = 1.0 + _ERF_P * az
    t0 = pl.reciprocal(d, approx=True)
    t = t0 * (2.0 - d * t0)                       # one Newton refinement
    poly = ((((a5 * t + a4) * t + a3) * t + a2) * t + a1) * t
    erf_abs = 1.0 - poly * jnp.exp(-az * az)
    erf = jnp.where(z < 0.0, -erf_abs, erf_abs)
    return 0.5 * x * (1.0 + erf)


def _prenorm_kernel(xp_ref, xc_ref, xn_ref, w12_ref, wtap_ref, hw_ref,
                    wout_ref, out_ref, y_scr, *, H, W, P):
    """One (batch image, row strip) step of the fused PreNorm forward.

    xp/xc/xn_ref : (1, C, P)  previous / current / next row-strip of x
                              (H*W flattened on lanes; prev/next are clamped
                              at the image edges -- every read of clamped data
                              is killed by the boundary masks).
    w12_ref      : (2C, C)    stacked 1x1 weights [w1_pw; w2_pw].
    wtap_ref     : (2C, 9)    depthwise 3x3 taps, k = kh*3 + kw.
    hw_ref       : (2, P)     f32 (row index, col index) of each strip pixel.
    wout_ref     : (C, 2C)    out_conv weight.
    out_ref      : (1, C, P)  output strip.
    y_scr        : (2C, >=P+2W+2) VMEM scratch: GELU(1x1(x)) for the strip
                              plus a (W+1)-pixel halo on each side.
    """
    guard = W + 1
    n_asm = P + 2 * guard

    # Assemble [last W+1 px of prev strip | strip | first W+1 px of next
    # strip]: exactly the lanes the 3x3 taps consume.  No wrapper-side pad,
    # no wasted matmul/GELU lanes.
    x_asm = jnp.concatenate(
        [xp_ref[0, :, P - guard:], xc_ref[0], xn_ref[0, :, :guard]], axis=1)

    # Both 1x1 convs + GELU as one MXU matmul (M = 2C, K = C, N = P + 2W + 2),
    # written to a VMEM scratch slab so the tap windows below are ref loads.
    y_scr[:, 0:n_asm] = _gelu(
        jnp.dot(w12_ref[...], x_asm, preferred_element_type=jnp.float32))

    # Image-boundary masks, built in-kernel from the tiny row/col index rows
    # (replaces the old premultiplied (9, 2C, N) mask-weight tensor).
    h = hw_ref[0:1, :]                                            # (1, P)
    w = hw_ref[1:2, :]                                            # (1, P)
    m_top = jnp.where(h > 0.0, 1.0, 0.0)
    m_bot = jnp.where(h < float(H - 1), 1.0, 0.0)
    m_lft = jnp.where(w > 0.0, 1.0, 0.0)
    m_rgt = jnp.where(w < float(W - 1), 1.0, 0.0)
    row_m = (m_top, None, m_bot)
    col_m = (m_lft, None, m_rgt)

    wt = wtap_ref[...]                                            # (2C, 9)

    # Depthwise 3x3: each tap is a lane-shifted window of the y slab loaded
    # straight from the scratch ref; boundaries are a (1, P) mask multiply.
    o = None
    for kh in range(3):
        for kw in range(3):
            k = kh * 3 + kw
            off = (kh - 1) * W + (kw - 1)
            win = y_scr[:, guard + off:guard + off + P]           # (2C, P)
            tap = wt[:, k:k + 1] * win
            if row_m[kh] is not None and col_m[kw] is not None:
                tap = tap * (row_m[kh] * col_m[kw])
            elif row_m[kh] is not None:
                tap = tap * row_m[kh]
            elif col_m[kw] is not None:
                tap = tap * col_m[kw]
            o = tap if o is None else o + tap

    g = _gelu(o)                                                  # (2C, P)

    # out_conv on concat(o1, o2): one matmul with K = 2C.
    out = jnp.dot(wout_ref[...], g, preferred_element_type=jnp.float32)
    out_ref[0] = out.astype(out_ref.dtype)


def _pick_rows_per_strip(H, W, rows_per_strip=None, target_lanes=32 * 1024):
    """Rows per strip R: R divides H and R*W is a multiple of 128 lanes (or
    R == H, whole image).  Sized so per-step VMEM stays ~8-16 MiB."""
    if rows_per_strip is not None:
        R = rows_per_strip
        assert H % R == 0, "rows_per_strip must divide H"
        assert R == H or (R * W) % 128 == 0, "strip must be 128-lane aligned"
        return R
    if H * W <= target_lanes:
        return H
    cands = [r for r in range(2, H)
             if H % r == 0 and (r * W) % 128 == 0 and r * W <= target_lanes]
    return max(cands) if cands else H


def prenorm_forward(x_nchw, params, rows_per_strip=None):
    w1_pw = params["w1_pw"]   # (C, C)     <- torch (C, C, 1, 1)
    w1_dw = params["w1_dw"]   # (C, 3, 3)  <- torch (C, 1, 3, 3)
    w2_pw = params["w2_pw"]
    w2_dw = params["w2_dw"]
    w_out = params["w_out"]   # (C, 2C)    <- torch (C, 2C, 1, 1)

    B, C, H, W = x_nchw.shape
    N = H * W
    R = _pick_rows_per_strip(H, W, rows_per_strip)
    S = H // R
    P = R * W                       # strip width on the 128-wide lane axis
    guard = W + 1
    assert P >= guard, "strip (or image) must span at least W+1 pixels"
    n_ys = ((P + 2 * guard + 127) // 128) * 128

    x_flat = x_nchw.reshape(B, C, N)      # free reshape; no pad, no copy

    # Small constants: fused 1x1 weights, per-channel 3x3 taps, pixel indices.
    w12 = jnp.concatenate([w1_pw, w2_pw], axis=0)                  # (2C, C)
    w_taps = jnp.concatenate([w1_dw.reshape(C, 9),
                              w2_dw.reshape(C, 9)], axis=0)        # (2C, 9)
    hw_idx = jnp.asarray(np.stack([np.repeat(np.arange(H), W),
                                   np.tile(np.arange(W), H)]), jnp.float32)

    kernel = functools.partial(_prenorm_kernel, H=H, W=W, P=P)

    # Advisory cost hint for XLA's scheduler.
    flops = int(B * N * (4 * C * C + 54 * C + 4 * C * C + 100 * C))
    transcendentals = int(B * N * 8 * C)          # exp + rcp, 2 GELU passes
    bytes_accessed = int(4 * (4 * B * C * N + 2 * N + 4 * C * C + 18 * C))

    last = S - 1
    out_flat = pl.pallas_call(
        kernel,
        out_shape=jax.ShapeDtypeStruct((B, C, N), jnp.float32),
        grid=(B, S),
        in_specs=[
            # previous / current / next row strip of x (clamped at the image
            # edges; the clamped halo data is only ever read under zero mask).
            pl.BlockSpec((1, C, P), lambda b, s: (b, 0, jnp.maximum(s - 1, 0))),
            pl.BlockSpec((1, C, P), lambda b, s: (b, 0, s)),
            pl.BlockSpec((1, C, P), lambda b, s: (b, 0, jnp.minimum(s + 1, last))),
            pl.BlockSpec((2 * C, C), lambda b, s: (0, 0)),
            pl.BlockSpec((2 * C, 9), lambda b, s: (0, 0)),
            pl.BlockSpec((2, P), lambda b, s: (0, s)),
            pl.BlockSpec((C, 2 * C), lambda b, s: (0, 0)),
        ],
        out_specs=pl.BlockSpec((1, C, P), lambda b, s: (b, 0, s)),
        scratch_shapes=[pltpu.VMEM((2 * C, n_ys), jnp.float32)],
        compiler_params=pltpu.CompilerParams(
            dimension_semantics=("parallel", "parallel"),
            vmem_limit_bytes=48 * 1024 * 1024),
        cost_estimate=pl.CostEstimate(flops=flops,
                                      transcendentals=transcendentals,
                                      bytes_accessed=bytes_accessed),
    )(x_flat, x_flat, x_flat, w12, w_taps, hw_idx, w_out)

    # TODO(synk): fetch only the two halo rows via a pl.ANY ref + manual DMA
    # (instead of whole neighbouring strips) to cut x reads from 3x to ~1x per
    # strip, and pack several small images per grid step along the lane axis
    # to fill the 8-sublane output vregs / amortize per-step overhead.
    return out_flat.reshape(B, C, H, W)


# ---------------------------- pure-JAX reference -----------------------------
def prenorm_reference(x_nchw, params):
    x = jnp.transpose(x_nchw, (0, 2, 3, 1))

    def conv1x1(v, w):  # w: (Cout, Cin)
        return jax.lax.conv_general_dilated(
            v, jnp.transpose(w)[None, None], (1, 1), 'VALID',
            dimension_numbers=('NHWC', 'HWIO', 'NHWC'))

    def dw3x3(v, w):    # w: (C, 3, 3)
        rhs = jnp.transpose(w, (1, 2, 0))[:, :, None, :]   # (3,3,1,C)
        return jax.lax.conv_general_dilated(
            v, rhs, (1, 1), ((1, 1), (1, 1)),
            dimension_numbers=('NHWC', 'HWIO', 'NHWC'),
            feature_group_count=v.shape[-1])

    g = lambda t: jax.nn.gelu(t, approximate=False)
    o1 = dw3x3(g(conv1x1(x, params["w1_pw"])), params["w1_dw"])
    o2 = dw3x3(g(conv1x1(x, params["w2_pw"])), params["w2_dw"])
    cat = jnp.concatenate([o1, o2], axis=-1)
    out = conv1x1(g(cat), params["w_out"])
    return jnp.transpose(out, (0, 3, 1, 2))


if __name__ == "__main__":
    B, C, H, W = 2, 4, 16, 16
    key = jax.random.PRNGKey(0)
    k1, k2, k3, k4, k5, kx = jax.random.split(key, 6)
    params = {
        "w1_pw": jax.random.normal(k1, (C, C), jnp.float32) * (1.0 / C ** 0.5),
        "w1_dw": jax.random.normal(k2, (C, 3, 3), jnp.float32) * (1.0 / 3.0),
        "w2_pw": jax.random.normal(k3, (C, C), jnp.float32) * (1.0 / C ** 0.5),
        "w2_dw": jax.random.normal(k4, (C, 3, 3), jnp.float32) * (1.0 / 3.0),
        "w_out": jax.random.normal(k5, (C, 2 * C), jnp.float32) * (1.0 / (2 * C) ** 0.5),
    }
    x = jax.random.normal(kx, (B, C, H, W), jnp.float32)

    ref = jax.block_until_ready(prenorm_reference(x, params))

    # Single-strip path (whole 16x16 image per grid step).
    out_single = jax.block_until_ready(jax.jit(prenorm_forward)(x, params))
    # Multi-strip path (two 8-row strips) to exercise the halo / clamp logic.
    out_strips = jax.block_until_ready(
        jax.jit(functools.partial(prenorm_forward, rows_per_strip=8))(x, params))

    for out in (out_single, out_strips):
        assert out.shape == (B, C, H, W)
        max_err = float(jnp.max(jnp.abs(out - ref)))
        assert max_err < 1e-3, f"mismatch vs reference: max_err={max_err}"
    print("KERNEL_OK")
</pallas_src>

<mosaic_0001>
module attributes {stable_mosaic.version = 11 : i64} {
  func.func @_prenorm_kernel(%arg0: i32, %arg1: i32, %arg2: memref<1x4x256xf32, #tpu.memory_space<vmem>>, %arg3: memref<1x4x256xf32, #tpu.memory_space<vmem>>, %arg4: memref<1x4x256xf32, #tpu.memory_space<vmem>>, %arg5: memref<8x4xf32, #tpu.memory_space<vmem>>, %arg6: memref<8x9xf32, #tpu.memory_space<vmem>>, %arg7: memref<2x256xf32, #tpu.memory_space<vmem>>, %arg8: memref<4x8xf32, #tpu.memory_space<vmem>>, %arg9: memref<1x4x256xf32, #tpu.memory_space<vmem>>, %arg10: memref<8x384xf32, #tpu.memory_space<vmem>>) attributes {dimension_semantics = [#tpu.dimension_semantics<parallel>, #tpu.dimension_semantics<parallel>], iteration_bounds = array<i64: 2, 1>, scalar_prefetch = 0 : i64, scratch_operands = 1 : i64, tpu.core_type = #tpu.core_type<tc>, window_params = [{transform_indices = @transform_0, window_bounds = array<i64: 1, 4, 256>}, {transform_indices = @transform_1, window_bounds = array<i64: 1, 4, 256>}, {transform_indices = @transform_2, window_bounds = array<i64: 1, 4, 256>}, {pipeline_mode = #tpu.pipeline_mode<synchronous>, transform_indices = @transform_3, window_bounds = array<i64: 8, 4>}, {pipeline_mode = #tpu.pipeline_mode<synchronous>, transform_indices = @transform_4, window_bounds = array<i64: 8, 9>}, {transform_indices = @transform_5, window_bounds = array<i64: 2, 256>}, {pipeline_mode = #tpu.pipeline_mode<synchronous>, transform_indices = @transform_6, window_bounds = array<i64: 4, 8>}, {transform_indices = @transform_7, window_bounds = array<i64: 1, 4, 256>}]} {
    %c0 = arith.constant 0 : index
    %c0_0 = arith.constant 0 : index
    %c239 = arith.constant 239 : index
    %0 = vector.load %arg2[%c0, %c0_0, %c239] : memref<1x4x256xf32, #tpu.memory_space<vmem>>, vector<1x4x17xf32>
    %1 = vector.shape_cast %0 : vector<1x4x17xf32> to vector<4x17xf32>
    %c0_1 = arith.constant 0 : index
    %c0_2 = arith.constant 0 : index
    %c0_3 = arith.constant 0 : index
    %2 = vector.load %arg3[%c0_1, %c0_2, %c0_3] : memref<1x4x256xf32, #tpu.memory_space<vmem>>, vector<1x4x256xf32>
    %3 = vector.shape_cast %2 : vector<1x4x256xf32> to vector<4x256xf32>
    %c0_4 = arith.constant 0 : index
    %c0_5 = arith.constant 0 : index
    %c0_6 = arith.constant 0 : index
    %4 = vector.load %arg4[%c0_4, %c0_5, %c0_6] : memref<1x4x256xf32, #tpu.memory_space<vmem>>, vector<1x4x17xf32>
    %5 = vector.shape_cast %4 : vector<1x4x17xf32> to vector<4x17xf32>
    %6 = tpu.concatenate %1, %3, %5 in 1 : vector<4x17xf32>, vector<4x256xf32>, vector<4x17xf32> -> vector<4x290xf32>
    %c0_7 = arith.constant 0 : index
    %c0_8 = arith.constant 0 : index
    %7 = vector.load %arg5[%c0_7, %c0_8] : memref<8x4xf32, #tpu.memory_space<vmem>>, vector<8x4xf32>
    %cst = arith.constant dense<0.000000e+00> : vector<8x290xf32>
    %8 = tpu.matmul %7, %6, %cst {dimension_numbers = #tpu.dot_dimension_numbers<[1], [0], [0], [1], [0, 0, 1, 1], [], []>} : vector<8x4xf32>, vector<4x290xf32>, vector<8x290xf32> -> vector<8x290xf32>
    %cst_9 = arith.constant 0.707106769 : f32
    %9 = vector.broadcast %cst_9 : f32 to vector<8x290xf32>
    %10 = arith.mulf %8, %9 : vector<8x290xf32>
    %11 = math.absf %10 : vector<8x290xf32>
    %cst_10 = arith.constant 0.327591091 : f32
    %12 = vector.broadcast %cst_10 : f32 to vector<8x290xf32>
    %13 = arith.mulf %12, %11 : vector<8x290xf32>
    %cst_11 = arith.constant 1.000000e+00 : f32
    %14 = vector.broadcast %cst_11 : f32 to vector<8x290xf32>
    %15 = arith.addf %14, %13 : vector<8x290xf32>
    %16 = tpu.reciprocal %15 {approx = true} : vector<8x290xf32> -> vector<8x290xf32>
    %17 = arith.mulf %15, %16 : vector<8x290xf32>
    %cst_12 = arith.constant 2.000000e+00 : f32
    %18 = vector.broadcast %cst_12 : f32 to vector<8x290xf32>
    %19 = arith.subf %18, %17 : vector<8x290xf32>
    %20 = arith.mulf %16, %19 : vector<8x290xf32>
    %cst_13 = arith.constant 1.06140542 : f32
    %21 = vector.broadcast %cst_13 : f32 to vector<8x290xf32>
    %22 = arith.mulf %21, %20 : vector<8x290xf32>
    %cst_14 = arith.constant -1.45315206 : f32
    %23 = vector.broadcast %cst_14 : f32 to vector<8x290xf32>
    %24 = arith.addf %22, %23 : vector<8x290xf32>
    %25 = arith.mulf %24, %20 : vector<8x290xf32>
    %cst_15 = arith.constant 1.42141378 : f32
    %26 = vector.broadcast %cst_15 : f32 to vector<8x290xf32>
    %27 = arith.addf %25, %26 : vector<8x290xf32>
    %28 = arith.mulf %27, %20 : vector<8x290xf32>
    %cst_16 = arith.constant -0.284496725 : f32
    %29 = vector.broadcast %cst_16 : f32 to vector<8x290xf32>
    %30 = arith.addf %28, %29 : vector<8x290xf32>
    %31 = arith.mulf %30, %20 : vector<8x290xf32>
    %cst_17 = arith.constant 0.254829586 : f32
    %32 = vector.broadcast %cst_17 : f32 to vector<8x290xf32>
    %33 = arith.addf %31, %32 : vector<8x290xf32>
    %34 = arith.mulf %33, %20 : vector<8x290xf32>
    %cst_18 = arith.constant 0.000000e+00 : f32
    %35 = vector.broadcast %cst_18 : f32 to vector<8x290xf32>
    %36 = arith.subf %35, %11 : vector<8x290xf32>
    %37 = arith.mulf %36, %11 : vector<8x290xf32>
    %38 = math.exp %37 : vector<8x290xf32>
    %39 = arith.mulf %34, %38 : vector<8x290xf32>
    %cst_19 = arith.constant 1.000000e+00 : f32
    %40 = vector.broadcast %cst_19 : f32 to vector<8x290xf32>
    %41 = arith.subf %40, %39 : vector<8x290xf32>
    %cst_20 = arith.constant 0.000000e+00 : f32
    %42 = vector.broadcast %cst_20 : f32 to vector<8x290xf32>
    %43 = arith.cmpf olt, %10, %42 : vector<8x290xf32>
    %cst_21 = arith.constant 0.000000e+00 : f32
    %44 = vector.broadcast %cst_21 : f32 to vector<8x290xf32>
    %45 = arith.subf %44, %41 : vector<8x290xf32>
    %46 = arith.select %43, %45, %41 : vector<8x290xi1>, vector<8x290xf32>
    %cst_22 = arith.constant 5.000000e-01 : f32
    %47 = vector.broadcast %cst_22 : f32 to vector<8x290xf32>
    %48 = arith.mulf %47, %8 : vector<8x290xf32>
    %cst_23 = arith.constant 1.000000e+00 : f32
    %49 = vector.broadcast %cst_23 : f32 to vector<8x290xf32>
    %50 = arith.addf %49, %46 : vector<8x290xf32>
    %51 = arith.mulf %48, %50 : vector<8x290xf32>
    %c0_24 = arith.constant 0 : index
    %c0_25 = arith.constant 0 : index
    %52 = vector.load %arg10[%c0_24, %c0_25] : memref<8x384xf32, #tpu.memory_space<vmem>>, vector<8x290xf32>
    tpu.vector_store %arg10[%c0_24, %c0_25], %51 {strides = array<i32>} : memref<8x384xf32, #tpu.memory_space<vmem>>, vector<8x290xf32>,
    %c0_26 = arith.constant 0 : index
    %c0_27 = arith.constant 0 : index
    %53 = vector.load %arg7[%c0_26, %c0_27] : memref<2x256xf32, #tpu.memory_space<vmem>>, vector<1x256xf32>
    %c1 = arith.constant 1 : index
    %c0_28 = arith.constant 0 : index
    %54 = vector.load %arg7[%c1, %c0_28] : memref<2x256xf32, #tpu.memory_space<vmem>>, vector<1x256xf32>
    %cst_29 = arith.constant 0.000000e+00 : f32
    %55 = vector.broadcast %cst_29 : f32 to vector<1x256xf32>
    %56 = arith.cmpf ogt, %53, %55 : vector<1x256xf32>
    %cst_30 = arith.constant 1.000000e+00 : f32
    %cst_31 = arith.constant 0.000000e+00 : f32
    %57 = vector.broadcast %cst_30 : f32 to vector<1x256xf32>
    %58 = vector.broadcast %cst_31 : f32 to vector<1x256xf32>
    %59 = arith.select %56, %57, %58 : vector<1x256xi1>, vector<1x256xf32>
    %cst_32 = arith.constant 1.500000e+01 : f32
    %60 = vector.broadcast %cst_32 : f32 to vector<1x256xf32>
    %61 = arith.cmpf olt, %53, %60 : vector<1x256xf32>
    %cst_33 = arith.constant 1.000000e+00 : f32
    %cst_34 = arith.constant 0.000000e+00 : f32
    %62 = vector.broadcast %cst_33 : f32 to vector<1x256xf32>
    %63 = vector.broadcast %cst_34 : f32 to vector<1x256xf32>
    %64 = arith.select %61, %62, %63 : vector<1x256xi1>, vector<1x256xf32>
    %cst_35 = arith.constant 0.000000e+00 : f32
    %65 = vector.broadcast %cst_35 : f32 to vector<1x256xf32>
    %66 = arith.cmpf ogt, %54, %65 : vector<1x256xf32>
    %cst_36 = arith.constant 1.000000e+00 : f32
    %cst_37 = arith.constant 0.000000e+00 : f32
    %67 = vector.broadcast %cst_36 : f32 to vector<1x256xf32>
    %68 = vector.broadcast %cst_37 : f32 to vector<1x256xf32>
    %69 = arith.select %66, %67, %68 : vector<1x256xi1>, vector<1x256xf32>
    %cst_38 = arith.constant 1.500000e+01 : f32
    %70 = vector.broadcast %cst_38 : f32 to vector<1x256xf32>
    %71 = arith.cmpf olt, %54, %70 : vector<1x256xf32>
    %cst_39 = arith.constant 1.000000e+00 : f32
    %cst_40 = arith.constant 0.000000e+00 : f32
    %72 = vector.broadcast %cst_39 : f32 to vector<1x256xf32>
    %73 = vector.broadcast %cst_40 : f32 to vector<1x256xf32>
    %74 = arith.select %71, %72, %73 : vector<1x256xi1>, vector<1x256xf32>
    %c0_41 = arith.constant 0 : index
    %c0_42 = arith.constant 0 : index
    %75 = vector.load %arg6[%c0_41, %c0_42] : memref<8x9xf32, #tpu.memory_space<vmem>>, vector<8x9xf32>
    %c0_43 = arith.constant 0 : index
    %c0_44 = arith.constant 0 : index
    %76 = vector.load %arg10[%c0_43, %c0_44] : memref<8x384xf32, #tpu.memory_space<vmem>>, vector<8x256xf32>
    %77 = vector.extract_strided_slice %75 {offsets = [0, 0], sizes = [8, 1], strides = [1, 1]} : vector<8x9xf32> to vector<8x1xf32>
    %78 = vector.broadcast %77 : vector<8x1xf32> to vector<8x256xf32>
    %79 = arith.mulf %78, %76 : vector<8x256xf32>
    %80 = arith.mulf %59, %69 : vector<1x256xf32>
    %81 = vector.broadcast %80 : vector<1x256xf32> to vector<8x256xf32>
    %82 = arith.mulf %79, %81 : vector<8x256xf32>
    %c0_45 = arith.constant 0 : index
    %c1_46 = arith.constant 1 : index
    %83 = vector.load %arg10[%c0_45, %c1_46] : memref<8x384xf32, #tpu.memory_space<vmem>>, vector<8x256xf32>
    %84 = vector.extract_strided_slice %75 {offsets = [0, 1], sizes = [8, 1], strides = [1, 1]} : vector<8x9xf32> to vector<8x1xf32>
    %85 = vector.broadcast %84 : vector<8x1xf32> to vector<8x256xf32>
    %86 = arith.mulf %85, %83 : vector<8x256xf32>
    %87 = vector.broadcast %59 : vector<1x256xf32> to vector<8x256xf32>
    %88 = arith.mulf %86, %87 : vector<8x256xf32>
    %89 = arith.addf %82, %88 : vector<8x256xf32>
    %c0_47 = arith.constant 0 : index
    %c2 = arith.constant 2 : index
    %90 = vector.load %arg10[%c0_47, %c2] : memref<8x384xf32, #tpu.memory_space<vmem>>, vector<8x256xf32>
    %91 = vector.extract_strided_slice %75 {offsets = [0, 2], sizes = [8, 1], strides = [1, 1]} : vector<8x9xf32> to vector<8x1xf32>
    %92 = vector.broadcast %91 : vector<8x1xf32> to vector<8x256xf32>
    %93 = arith.mulf %92, %90 : vector<8x256xf32>
    %94 = arith.mulf %59, %74 : vector<1x256xf32>
    %95 = vector.broadcast %94 : vector<1x256xf32> to vector<8x256xf32>
    %96 = arith.mulf %93, %95 : vector<8x256xf32>
    %97 = arith.addf %89, %96 : vector<8x256xf32>
    %c0_48 = arith.constant 0 : index
    %c16 = arith.constant 16 : index
    %98 = vector.load %arg10[%c0_48, %c16] : memref<8x384xf32, #tpu.memory_space<vmem>>, vector<8x256xf32>
    %99 = vector.extract_strided_slice %75 {offsets = [0, 3], sizes = [8, 1], strides = [1, 1]} : vector<8x9xf32> to vector<8x1xf32>
    %100 = vector.broadcast %99 : vector<8x1xf32> to vector<8x256xf32>
    %101 = arith.mulf %100, %98 : vector<8x256xf32>
    %102 = vector.broadcast %69 : vector<1x256xf32> to vector<8x256xf32>
    %103 = arith.mulf %101, %102 : vector<8x256xf32>
    %104 = arith.addf %97, %103 : vector<8x256xf32>
    %c0_49 = arith.constant 0 : index
    %c17 = arith.constant 17 : index
    %105 = vector.load %arg10[%c0_49, %c17] : memref<8x384xf32, #tpu.memory_space<vmem>>, vector<8x256xf32>
    %106 = vector.extract_strided_slice %75 {offsets = [0, 4], sizes = [8, 1], strides = [1, 1]} : vector<8x9xf32> to vector<8x1xf32>
    %107 = vector.broadcast %106 : vector<8x1xf32> to vector<8x256xf32>
    %108 = arith.mulf %107, %105 : vector<8x256xf32>
    %109 = arith.addf %104, %108 : vector<8x256xf32>
    %c0_50 = arith.constant 0 : index
    %c18 = arith.constant 18 : index
    %110 = vector.load %arg10[%c0_50, %c18] : memref<8x384xf32, #tpu.memory_space<vmem>>, vector<8x256xf32>
    %111 = vector.extract_strided_slice %75 {offsets = [0, 5], sizes = [8, 1], strides = [1, 1]} : vector<8x9xf32> to vector<8x1xf32>
    %112 = vector.broadcast %111 : vector<8x1xf32> to vector<8x256xf32>
    %113 = arith.mulf %112, %110 : vector<8x256xf32>
    %114 = vector.broadcast %74 : vector<1x256xf32> to vector<8x256xf32>
    %115 = arith.mulf %113, %114 : vector<8x256xf32>
    %116 = arith.addf %109, %115 : vector<8x256xf32>
    %c0_51 = arith.constant 0 : index
    %c32 = arith.constant 32 : index
    %117 = vector.load %arg10[%c0_51, %c32] : memref<8x384xf32, #tpu.memory_space<vmem>>, vector<8x256xf32>
    %118 = vector.extract_strided_slice %75 {offsets = [0, 6], sizes = [8, 1], strides = [1, 1]} : vector<8x9xf32> to vector<8x1xf32>
    %119 = vector.broadcast %118 : vector<8x1xf32> to vector<8x256xf32>
    %120 = arith.mulf %119, %117 : vector<8x256xf32>
    %121 = arith.mulf %64, %69 : vector<1x256xf32>
    %122 = vector.broadcast %121 : vector<1x256xf32> to vector<8x256xf32>
    %123 = arith.mulf %120, %122 : vector<8x256xf32>
    %124 = arith.addf %116, %123 : vector<8x256xf32>
    %c0_52 = arith.constant 0 : index
    %c33 = arith.constant 33 : index
    %125 = vector.load %arg10[%c0_52, %c33] : memref<8x384xf32, #tpu.memory_space<vmem>>, vector<8x256xf32>
    %126 = vector.extract_strided_slice %75 {offsets = [0, 7], sizes = [8, 1], strides = [1, 1]} : vector<8x9xf32> to vector<8x1xf32>
    %127 = vector.broadcast %126 : vector<8x1xf32> to vector<8x256xf32>
    %128 = arith.mulf %127, %125 : vector<8x256xf32>
    %129 = vector.broadcast %64 : vector<1x256xf32> to vector<8x256xf32>
    %130 = arith.mulf %128, %129 : vector<8x256xf32>
    %131 = arith.addf %124, %130 : vector<8x256xf32>
    %c0_53 = arith.constant 0 : index
    %c34 = arith.constant 34 : index
    %132 = vector.load %arg10[%c0_53, %c34] : memref<8x384xf32, #tpu.memory_space<vmem>>, vector<8x256xf32>
    %133 = vector.extract_strided_slice %75 {offsets = [0, 8], sizes = [8, 1], strides = [1, 1]} : vector<8x9xf32> to vector<8x1xf32>
    %134 = vector.broadcast %133 : vector<8x1xf32> to vector<8x256xf32>
    %135 = arith.mulf %134, %132 : vector<8x256xf32>
    %136 = arith.mulf %64, %74 : vector<1x256xf32>
    %137 = vector.broadcast %136 : vector<1x256xf32> to vector<8x256xf32>
    %138 = arith.mulf %135, %137 : vector<8x256xf32>
    %139 = arith.addf %131, %138 : vector<8x256xf32>
    %cst_54 = arith.constant 0.707106769 : f32
    %140 = vector.broadcast %cst_54 : f32 to vector<8x256xf32>
    %141 = arith.mulf %139, %140 : vector<8x256xf32>
    %142 = math.absf %141 : vector<8x256xf32>
    %cst_55 = arith.constant 0.327591091 : f32
    %143 = vector.broadcast %cst_55 : f32 to vector<8x256xf32>
    %144 = arith.mulf %143, %142 : vector<8x256xf32>
    %cst_56 = arith.constant 1.000000e+00 : f32
    %145 = vector.broadcast %cst_56 : f32 to vector<8x256xf32>
    %146 = arith.addf %145, %144 : vector<8x256xf32>
    %147 = tpu.reciprocal %146 {approx = true} : vector<8x256xf32> -> vector<8x256xf32>
    %148 = arith.mulf %146, %147 : vector<8x256xf32>
    %cst_57 = arith.constant 2.000000e+00 : f32
    %149 = vector.broadcast %cst_57 : f32 to vector<8x256xf32>
    %150 = arith.subf %149, %148 : vector<8x256xf32>
    %151 = arith.mulf %147, %150 : vector<8x256xf32>
    %cst_58 = arith.constant 1.06140542 : f32
    %152 = vector.broadcast %cst_58 : f32 to vector<8x256xf32>
    %153 = arith.mulf %152, %151 : vector<8x256xf32>
    %cst_59 = arith.constant -1.45315206 : f32
    %154 = vector.broadcast %cst_59 : f32 to vector<8x256xf32>
    %155 = arith.addf %153, %154 : vector<8x256xf32>
    %156 = arith.mulf %155, %151 : vector<8x256xf32>
    %cst_60 = arith.constant 1.42141378 : f32
    %157 = vector.broadcast %cst_60 : f32 to vector<8x256xf32>
    %158 = arith.addf %156, %157 : vector<8x256xf32>
    %159 = arith.mulf %158, %151 : vector<8x256xf32>
    %cst_61 = arith.constant -0.284496725 : f32
    %160 = vector.broadcast %cst_61 : f32 to vector<8x256xf32>
    %161 = arith.addf %159, %160 : vector<8x256xf32>
    %162 = arith.mulf %161, %151 : vector<8x256xf32>
    %cst_62 = arith.constant 0.254829586 : f32
    %163 = vector.broadcast %cst_62 : f32 to vector<8x256xf32>
    %164 = arith.addf %162, %163 : vector<8x256xf32>
    %165 = arith.mulf %164, %151 : vector<8x256xf32>
    %cst_63 = arith.constant 0.000000e+00 : f32
    %166 = vector.broadcast %cst_63 : f32 to vector<8x256xf32>
    %167 = arith.subf %166, %142 : vector<8x256xf32>
    %168 = arith.mulf %167, %142 : vector<8x256xf32>
    %169 = math.exp %168 : vector<8x256xf32>
    %170 = arith.mulf %165, %169 : vector<8x256xf32>
    %cst_64 = arith.constant 1.000000e+00 : f32
    %171 = vector.broadcast %cst_64 : f32 to vector<8x256xf32>
    %172 = arith.subf %171, %170 : vector<8x256xf32>
    %cst_65 = arith.constant 0.000000e+00 : f32
    %173 = vector.broadcast %cst_65 : f32 to vector<8x256xf32>
    %174 = arith.cmpf olt, %141, %173 : vector<8x256xf32>
    %cst_66 = arith.constant 0.000000e+00 : f32
    %175 = vector.broadcast %cst_66 : f32 to vector<8x256xf32>
    %176 = arith.subf %175, %172 : vector<8x256xf32>
    %177 = arith.select %174, %176, %172 : vector<8x256xi1>, vector<8x256xf32>
    %cst_67 = arith.constant 5.000000e-01 : f32
    %178 = vector.broadcast %cst_67 : f32 to vector<8x256xf32>
    %179 = arith.mulf %178, %139 : vector<8x256xf32>
    %cst_68 = arith.constant 1.000000e+00 : f32
    %180 = vector.broadcast %cst_68 : f32 to vector<8x256xf32>
    %181 = arith.addf %180, %177 : vector<8x256xf32>
    %182 = arith.mulf %179, %181 : vector<8x256xf32>
    %c0_69 = arith.constant 0 : index
    %c0_70 = arith.constant 0 : index
    %183 = vector.load %arg8[%c0_69, %c0_70] : memref<4x8xf32, #tpu.memory_space<vmem>>, vector<4x8xf32>
    %cst_71 = arith.constant dense<0.000000e+00> : vector<4x256xf32>
    %184 = tpu.matmul %183, %182, %cst_71 {dimension_numbers = #tpu.dot_dimension_numbers<[1], [0], [0], [1], [0, 0, 1, 1], [], []>} : vector<4x8xf32>, vector<8x256xf32>, vector<4x256xf32> -> vector<4x256xf32>
    %c0_72 = arith.constant 0 : index
    %c0_73 = arith.constant 0 : index
    %c0_74 = arith.constant 0 : index
    %185 = vector.load %arg9[%c0_72, %c0_73, %c0_74] : memref<1x4x256xf32, #tpu.memory_space<vmem>>, vector<1x4x256xf32>
    %186 = vector.shape_cast %185 : vector<1x4x256xf32> to vector<4x256xf32>
    %187 = vector.shape_cast %184 : vector<4x256xf32> to vector<1x4x256xf32>
    tpu.vector_store %arg9[%c0_72, %c0_73, %c0_74], %187 {strides = array<i32>} : memref<1x4x256xf32, #tpu.memory_space<vmem>>, vector<1x4x256xf32>,
    return
  }
  func.func @transform_0(%arg0: i32, %arg1: i32) -> (i32, i32, i32) {
    %c1_i32 = arith.constant 1 : i32
    %0 = arith.subi %arg1, %c1_i32 : i32
    %c0_i32 = arith.constant 0 : i32
    %1 = arith.maxsi %0, %c0_i32 : i32
    %c0_i32_0 = arith.constant 0 : i32
    %c0_i32_1 = arith.constant 0 : i32
    return %arg0, %c0_i32_0, %1 : i32, i32, i32
  }
  func.func @transform_1(%arg0: i32, %arg1: i32) -> (i32, i32, i32) {
    %c0_i32 = arith.constant 0 : i32
    %c0_i32_0 = arith.constant 0 : i32
    return %arg0, %c0_i32, %arg1 : i32, i32, i32
  }
  func.func @transform_2(%arg0: i32, %arg1: i32) -> (i32, i32, i32) {
    %c1_i32 = arith.constant 1 : i32
    %0 = arith.addi %arg1, %c1_i32 : i32
    %c0_i32 = arith.constant 0 : i32
    %1 = arith.minsi %0, %c0_i32 : i32
    %c0_i32_0 = arith.constant 0 : i32
    %c0_i32_1 = arith.constant 0 : i32
    return %arg0, %c0_i32_0, %1 : i32, i32, i32
  }
  func.func @transform_3(%arg0: i32, %arg1: i32) -> (i32, i32) {
    %c0_i32 = arith.constant 0 : i32
    %c0_i32_0 = arith.constant 0 : i32
    %c0_i32_1 = arith.constant 0 : i32
    return %c0_i32, %c0_i32_0 : i32, i32
  }
  func.func @transform_4(%arg0: i32, %arg1: i32) -> (i32, i32) {
    %c0_i32 = arith.constant 0 : i32
    %c0_i32_0 = arith.constant 0 : i32
    %c0_i32_1 = arith.constant 0 : i32
    return %c0_i32, %c0_i32_0 : i32, i32
  }
  func.func @transform_5(%arg0: i32, %arg1: i32) -> (i32, i32) {
    %c0_i32 = arith.constant 0 : i32
    %c0_i32_0 = arith.constant 0 : i32
    return %c0_i32, %arg1 : i32, i32
  }
  func.func @transform_6(%arg0: i32, %arg1: i32) -> (i32, i32) {
    %c0_i32 = arith.constant 0 : i32
    %c0_i32_0 = arith.constant 0 : i32
    %c0_i32_1 = arith.constant 0 : i32
    return %c0_i32, %c0_i32_0 : i32, i32
  }
  func.func @transform_7(%arg0: i32, %arg1: i32) -> (i32, i32, i32) {
    %c0_i32 = arith.constant 0 : i32
    %c0_i32_0 = arith.constant 0 : i32
    return %arg0, %c0_i32, %arg1 : i32, i32, i32
  }
}

</mosaic_0001>

<llo_original>
// kernel: prenorm_forward.1
$region0: #{prenorm_forward.1}
  #allocation0 [shape = 'u32[]', space=smem, size = 0x4, offset = 0x4, fixed_abs, tag = 'smem constant byte address 0x4 - core index']
  #allocation1 [shape = 'u32[144,128]{1,0:T(1,128)}', space=vmem, size = 0x12000, scoped, tag = 'internal scratch']
  #allocation2 [shape = 'f32[8,384]{1,0:T(8,128)}', space=vmem, size = 0x3000, scoped, tag = 'scratch operand']
  %s0 = inlined_call_operand.vmem [shape: f32[2,4,256], index: 0, kind: input, shape index: {}, may-alias: {0,1,2}]
  %s1 = inlined_call_operand.vmem [shape: f32[2,4,256], index: 1, kind: input, shape index: {}, may-alias: {0,1,2}]
  %s2 = inlined_call_operand.vmem [shape: f32[2,4,256], index: 2, kind: input, shape index: {}, may-alias: {0,1,2}]
  %s3 = inlined_call_operand.vmem [shape: f32[8,4], index: 3, kind: input, shape index: {}]
  %s4 = inlined_call_operand.vmem [shape: f32[8,9], index: 4, kind: input, shape index: {}]
  %s5 = inlined_call_operand.vmem [shape: f32[2,256], index: 5, kind: input, shape index: {}]
  %s6 = inlined_call_operand.vmem [shape: f32[4,8], index: 6, kind: input, shape index: {}]
  %s7 = inlined_call_operand.vmem [shape: f32[2,4,256], index: 7, kind: output, shape index: {}]
  %s8 = sld [smem:[#allocation0]]
  $region61: #{prenorm_forward.1} parent=0
    _
  %s10 = ssub.s32 1, %s8
  %s11 = scalar_select 0, %s10, %s8
  loop: start=0, step=1, limit=4
  $region2: #{prenorm_forward.1} parent=0 // loop_pre_header
    _
  $region3: #{prenorm_forward.1} parent=0 // loop_header
    %s13 = sphi 0, %s17
    %p14 = scmp.ge.s32.totalorder %s13, 4
    %s20 = sphi 0, %s32
    %s21 = sphi 0, %s28
    %s22 = sphi 0, %s20
    %s23 = sphi 0, %s21
    %s24 = sphi 0, %s22
    %s25 = sphi 0, %s23
    %s43 = sphi 0, %s45
    %s46 = sphi 0, %s43
    %s47 = sphi 0, %s46
    %s63 = sphi 0, %s47
    %s71 = sphi 0, %s73
    %s74 = sphi 0, %s71
    %s75 = sphi 0, %s74
    %s91 = sphi 0, %s75
    %s105 = sphi 0, %s107
    %s108 = sphi 0, %s105
    %s109 = sphi 0, %s108
    %s125 = sphi 0, %s109
    %s129 = sphi 0, %s129
    %s131 = sphi 0, %s129
    %s132 = sphi 0, %s131
    %s146 = sphi 0, %s132
    %s150 = sphi 0, %s150
    %s152 = sphi 0, %s150
    %s153 = sphi 0, %s152
    %s167 = sphi 0, %s153
    %s173 = sphi 0, %s175
    %s176 = sphi 0, %s173
    %s177 = sphi 0, %s176
    %s193 = sphi 0, %s177
    %s197 = sphi 0, %s197
    %s199 = sphi 0, %s197
    %s200 = sphi 0, %s199
    %s214 = sphi 0, %s200
    %s222 = sphi 0, %s224
    %s225 = sphi 0, %s222
    %s226 = sphi 0, %s225
    %s242 = sphi 0, %s226
  $region4: #{prenorm_forward.1} parent=0 // loop_header_branch
    %16 = sbr.rel (%p14) target = $region8
  $region5: #{prenorm_forward.1} parent=0 // loop_body
    %s18 = ssub.s32 %s13, 1
    %s19 = ssub.s32 %s13, 2
    %s26 = sadd.s32 1, %s21
    %p27 = scmp.ge.s32.totalorder %s26, 1
    %s28 = scalar_select %p27, 0, %s26
    %s29 = sadd.s32 1, %s20
    %s30 = scalar_select %p27, %s29, %s20
    %p31 = scmp.ge.s32.totalorder %s30, 2
    %s32 = scalar_select %p31, 0, %s30
    %s33 = ssub.s32 %s21, 1
    %p34 = scmp.gt.s32.totalorder %s33, 0
    %s35 = scalar_select %p34, %s33, 0
    %s36 = ssub.s32 %s28, 1
    %p37 = scmp.gt.s32.totalorder %s36, 0
    %s38 = scalar_select %p37, %s36, 0
    %s39 = ssub.s32 %s20, %s32
    %s40 = ssub.s32 %s35, %s38
    %s41 = sor.u32 %s39, %s40
    %p42 = scmp.eq.s32.totalorder %s41, 0
    %s44 = sadd.s32 %s43, 1
    %s45 = scalar_select %p42, %s43, %s44
    %p48 = pneg %p42
    %p49 = scmp.eq.s32.totalorder %s13, 1
    %p50 = por %p48, %p49
    %p51 = scmp.ne.s32.totalorder %s43, %s46
    %p52 = scmp.eq.s32.totalorder %s13, 0
    %p53 = por %p51, %p52
    %p54 = scmp.ne.s32.totalorder %s43, %s46
    %p55 = scmp.eq.s32.totalorder %s18, 1
    %p56 = por %p54, %p55
    %p57 = scmp.ne.s32.totalorder %s46, %s47
    %p58 = scmp.eq.s32.totalorder %s18, 0
    %p59 = por %p57, %p58
    %p60 = scmp.ne.s32.totalorder %s46, %s47
    %p61 = scmp.eq.s32.totalorder %s19, 1
    %p62 = por %p60, %p61
    %p64 = scmp.ne.s32.totalorder %s47, %s63
    %p65 = scmp.eq.s32.totalorder %s19, 0
    %p66 = por %p64, %p65
    %s67 = ssub.s32 %s20, %s32
    %s68 = ssub.s32 %s21, %s28
    %s69 = sor.u32 %s67, %s68
    %p70 = scmp.eq.s32.totalorder %s69, 0
    %s72 = sadd.s32 %s71, 1
    %s73 = scalar_select %p70, %s71, %s72
    %p76 = pneg %p70
    %p77 = scmp.eq.s32.totalorder %s13, 1
    %p78 = por %p76, %p77
    %p79 = scmp.ne.s32.totalorder %s71, %s74
    %p80 = scmp.eq.s32.totalorder %s13, 0
    %p81 = por %p79, %p80
    %p82 = scmp.ne.s32.totalorder %s71, %s74
    %p83 = scmp.eq.s32.totalorder %s18, 1
    %p84 = por %p82, %p83
    %p85 = scmp.ne.s32.totalorder %s74, %s75
    %p86 = scmp.eq.s32.totalorder %s18, 0
    %p87 = por %p85, %p86
    %p88 = scmp.ne.s32.totalorder %s74, %s75
    %p89 = scmp.eq.s32.totalorder %s19, 1
    %p90 = por %p88, %p89
    %p92 = scmp.ne.s32.totalorder %s75, %s91
    %p93 = scmp.eq.s32.totalorder %s19, 0
    %p94 = por %p92, %p93
    %s95 = sadd.s32 %s21, 1
    %p96 = scmp.lt.s32.totalorder %s95, 0
    %s97 = scalar_select %p96, %s95, 0
    %s98 = sadd.s32 %s28, 1
    %p99 = scmp.lt.s32.totalorder %s98, 0
    %s100 = scalar_select %p99, %s98, 0
    %s101 = ssub.s32 %s20, %s32
    %s102 = ssub.s32 %s97, %s100
    %s103 = sor.u32 %s101, %s102
    %p104 = scmp.eq.s32.totalorder %s103, 0
    %s106 = sadd.s32 %s105, 1
    %s107 = scalar_select %p104, %s105, %s106
    %p110 = pneg %p104
    %p111 = scmp.eq.s32.totalorder %s13, 1
    %p112 = por %p110, %p111
    %p113 = scmp.ne.s32.totalorder %s105, %s108
    %p114 = scmp.eq.s32.totalorder %s13, 0
    %p115 = por %p113, %p114
    %p116 = scmp.ne.s32.totalorder %s105, %s108
    %p117 = scmp.eq.s32.totalorder %s18, 1
    %p118 = por %p116, %p117
    %p119 = scmp.ne.s32.totalorder %s108, %s109
    %p120 = scmp.eq.s32.totalorder %s18, 0
    %p121 = por %p119, %p120
    %p122 = scmp.ne.s32.totalorder %s108, %s109
    %p123 = scmp.eq.s32.totalorder %s19, 1
    %p124 = por %p122, %p123
    %p126 = scmp.ne.s32.totalorder %s109, %s125
    %p127 = scmp.eq.s32.totalorder %s19, 0
    %p128 = por %p126, %p127
    %s130 = sadd.s32 %s129, 1
    %p133 = scmp.eq.s32.totalorder %s13, 1
    %p134 = scmp.ne.s32.totalorder %s129, %s131
    %p135 = scmp.eq.s32.totalorder %s13, 0
    %p136 = por %p134, %p135
    %p137 = scmp.ne.s32.totalorder %s129, %s131
    %p138 = scmp.eq.s32.totalorder %s18, 1
    %p139 = por %p137, %p138
    %p140 = scmp.ne.s32.totalorder %s131, %s132
    %p141 = scmp.eq.s32.totalorder %s18, 0
    %p142 = por %p140, %p141
    %p143 = scmp.ne.s32.totalorder %s131, %s132
    %p144 = scmp.eq.s32.totalorder %s19, 1
    %p145 = por %p143, %p144
    %p147 = scmp.ne.s32.totalorder %s132, %s146
    %p148 = scmp.eq.s32.totalorder %s19, 0
    %p149 = por %p147, %p148
    %s151 = sadd.s32 %s150, 1
    %p154 = scmp.eq.s32.totalorder %s13, 1
    %p155 = scmp.ne.s32.totalorder %s150, %s152
    %p156 = scmp.eq.s32.totalorder %s13, 0
    %p157 = por %p155, %p156
    %p158 = scmp.ne.s32.totalorder %s150, %s152
    %p159 = scmp.eq.s32.totalorder %s18, 1
    %p160 = por %p158, %p159
    %p161 = scmp.ne.s32.totalorder %s152, %s153
    %p162 = scmp.eq.s32.totalorder %s18, 0
    %p163 = por %p161, %p162
    %p164 = scmp.ne.s32.totalorder %s152, %s153
    %p165 = scmp.eq.s32.totalorder %s19, 1
    %p166 = por %p164, %p165
    %p168 = scmp.ne.s32.totalorder %s153, %s167
    %p169 = scmp.eq.s32.totalorder %s19, 0
    %p170 = por %p168, %p169
    %s171 = ssub.s32 %s21, %s28
    %p172 = scmp.eq.s32.totalorder %s171, 0
    %s174 = sadd.s32 %s173, 1
    %s175 = scalar_select %p172, %s173, %s174
    %p178 = pneg %p172
    %p179 = scmp.eq.s32.totalorder %s13, 1
    %p180 = por %p178, %p179
    %p181 = scmp.ne.s32.totalorder %s173, %s176
    %p182 = scmp.eq.s32.totalorder %s13, 0
    %p183 = por %p181, %p182
    %p184 = scmp.ne.s32.totalorder %s173, %s176
    %p185 = scmp.eq.s32.totalorder %s18, 1
    %p186 = por %p184, %p185
    %p187 = scmp.ne.s32.totalorder %s176, %s177
    %p188 = scmp.eq.s32.totalorder %s18, 0
    %p189 = por %p187, %p188
    %p190 = scmp.ne.s32.totalorder %s176, %s177
    %p191 = scmp.eq.s32.totalorder %s19, 1
    %p192 = por %p190, %p191
    %p194 = scmp.ne.s32.totalorder %s177, %s193
    %p195 = scmp.eq.s32.totalorder %s19, 0
    %p196 = por %p194, %p195
    %s198 = sadd.s32 %s197, 1
    %p201 = scmp.eq.s32.totalorder %s13, 1
    %p202 = scmp.ne.s32.totalorder %s197, %s199
    %p203 = scmp.eq.s32.totalorder %s13, 0
    %p204 = por %p202, %p203
    %p205 = scmp.ne.s32.totalorder %s197, %s199
    %p206 = scmp.eq.s32.totalorder %s18, 1
    %p207 = por %p205, %p206
    %p208 = scmp.ne.s32.totalorder %s199, %s200
    %p209 = scmp.eq.s32.totalorder %s18, 0
    %p210 = por %p208, %p209
    %p211 = scmp.ne.s32.totalorder %s199, %s200
    %p212 = scmp.eq.s32.totalorder %s19, 1
    %p213 = por %p211, %p212
    %p215 = scmp.ne.s32.totalorder %s200, %s214
    %p216 = scmp.eq.s32.totalorder %s19, 0
    %p217 = por %p215, %p216
    %s218 = ssub.s32 %s20, %s32
    %s219 = ssub.s32 %s21, %s28
    %s220 = sor.u32 %s218, %s219
    %p221 = scmp.eq.s32.totalorder %s220, 0
    %s223 = sadd.s32 %s222, 1
    %s224 = scalar_select %p221, %s222, %s223
    %p227 = pneg %p221
    %p228 = scmp.eq.s32.totalorder %s13, 1
    %p229 = por %p227, %p228
    %p230 = scmp.ne.s32.totalorder %s222, %s225
    %p231 = scmp.eq.s32.totalorder %s13, 0
    %p232 = por %p230, %p231
    %p233 = scmp.ne.s32.totalorder %s222, %s225
    %p234 = scmp.eq.s32.totalorder %s18, 1
    %p235 = por %p233, %p234
    %p236 = scmp.ne.s32.totalorder %s225, %s226
    %p237 = scmp.eq.s32.totalorder %s18, 0
    %p238 = por %p236, %p237
    %p239 = scmp.ne.s32.totalorder %s225, %s226
    %p240 = scmp.eq.s32.totalorder %s19, 1
    %p241 = por %p239, %p240
    %p243 = scmp.ne.s32.totalorder %s226, %s242
    %p244 = scmp.eq.s32.totalorder %s19, 0
    %p245 = por %p243, %p244
    %p246 = scmp.le.s32.totalorder 1, %s13
    %p247 = scmp.lt.s32.totalorder %s13, 3
    %p248 = pnand %p246, %p247
    %p249 = pneg %p248
    // Predicated region
    $region9: #{prenorm_forward.1} parent=5 // pred_check
      _
    $region10: #{prenorm_forward.1} parent=5 // pred_check_branch
      %251 = sbr.rel (%p248) target = $region12
    $region11: #{prenorm_forward.1} parent=5 // pred_region
      %s252 = ssub.s32 %s13, 1
      // Predicated region
      $region13: #{prenorm_forward.1} parent=11 // pred_check
        %p253 = pneg %p142
      $region14: #{prenorm_forward.1} parent=11 // pred_check_branch
        %255 = sbr.rel (%p253) target = $region16
      $region15: #{prenorm_forward.1} parent=11 // pred_region
        _
      $region16: #{prenorm_forward.1} parent=11 // pred_fallthru
        _
      // Predicated region
      $region17: #{prenorm_forward.1} parent=11 // pred_check
        %p256 = pneg %p163
      $region18: #{prenorm_forward.1} parent=11 // pred_check_branch
        %258 = sbr.rel (%p256) target = $region20
      $region19: #{prenorm_forward.1} parent=11 // pred_region
        _
      $region20: #{prenorm_forward.1} parent=11 // pred_fallthru
        _
      // Predicated region
      $region21: #{prenorm_forward.1} parent=11 // pred_check
        %p259 = pneg %p189
      $region22: #{prenorm_forward.1} parent=11 // pred_check_branch
        %261 = sbr.rel (%p259) target = $region24
      $region23: #{prenorm_forward.1} parent=11 // pred_region
        %s262 = smul.u32 2, %s23
        %p263 = scmp.lt.s32.totalorder %s262, 1
        %s264 = scalar_select %p263, %s262, 1
        %s265 = smul.addr %s264, 2
        %s266 = scalar_lea.vmem %s5, %s265
        %s267 = smul.u32 2, %s23
      $region24: #{prenorm_forward.1} parent=11 // pred_fallthru
        _
      // Predicated region
      $region25: #{prenorm_forward.1} parent=11 // pred_check
        %p268 = pneg %p210
      $region26: #{prenorm_forward.1} parent=11 // pred_check_branch
        %270 = sbr.rel (%p268) target = $region28
      $region27: #{prenorm_forward.1} parent=11 // pred_region
        _
      $region28: #{prenorm_forward.1} parent=11 // pred_fallthru
        _
    $region12: #{prenorm_forward.1} parent=5 // pred_fallthru
      _
    %p271 = scmp.lt.s32.totalorder %s13, 2
    // Predicated region
    $region29: #{prenorm_forward.1} parent=5 // pred_check
      %p272 = pneg %p271
    $region30: #{prenorm_forward.1} parent=5 // pred_check_branch
      %274 = sbr.rel (%p272) target = $region32
    $region31: #{prenorm_forward.1} parent=5 // pred_region
      // Predicated region
      $region33: #{prenorm_forward.1} parent=31 // pred_check
        %p275 = pneg %p53
      $region34: #{prenorm_forward.1} parent=31 // pred_check_branch
        %277 = sbr.rel (%p275) target = $region36
      $region35: #{prenorm_forward.1} parent=31 // pred_region
        %s278 = ssub.s32 %s21, 1
        %p279 = scmp.gt.s32.totalorder %s278, 0
        %s280 = scalar_select %p279, %s278, 0
        %s281 = smul.u32 2, %s280
        %p282 = scmp.lt.s32.totalorder %s20, 1
        %s283 = scalar_select %p282, %s20, 1
        %p284 = scmp.lt.s32.totalorder %s281, 1
        %s285 = scalar_select %p284, %s281, 1
        %s286 = smul.addr %s283, 2
        %s287 = sadd.s32 %s285, %s286
        %s288 = smul.addr %s287, 4
        %s289 = scalar_lea.vmem %s0, %s288
        %s290 = ssub.s32 %s21, 1
        %p291 = scmp.gt.s32.totalorder %s290, 0
        %s292 = scalar_select %p291, %s290, 0
        %s293 = smul.u32 2, %s292
      $region36: #{prenorm_forward.1} parent=31 // pred_fallthru
        _
      // Predicated region
      $region37: #{prenorm_forward.1} parent=31 // pred_check
        %p294 = pneg %p81
      $region38: #{prenorm_forward.1} parent=31 // pred_check_branch
        %296 = sbr.rel (%p294) target = $region40
      $region39: #{prenorm_forward.1} parent=31 // pred_region
        %s297 = smul.u32 2, %s21
        %p298 = scmp.lt.s32.totalorder %s20, 1
        %s299 = scalar_select %p298, %s20, 1
        %p300 = scmp.lt.s32.totalorder %s297, 1
        %s301 = scalar_select %p300, %s297, 1
        %s302 = smul.addr %s299, 2
        %s303 = sadd.s32 %s301, %s302
        %s304 = smul.addr %s303, 4
        %s305 = scalar_lea.vmem %s1, %s304
        %s306 = smul.u32 2, %s21
      $region40: #{prenorm_forward.1} parent=31 // pred_fallthru
        _
      // Predicated region
      $region41: #{prenorm_forward.1} parent=31 // pred_check
        %p307 = pneg %p115
      $region42: #{prenorm_forward.1} parent=31 // pred_check_branch
        %309 = sbr.rel (%p307) target = $region44
      $region43: #{prenorm_forward.1} parent=31 // pred_region
        %s310 = sadd.s32 %s21, 1
        %p311 = scmp.lt.s32.totalorder %s310, 0
        %s312 = scalar_select %p311, %s310, 0
        %s313 = smul.u32 2, %s312
        %p314 = scmp.lt.s32.totalorder %s20, 1
        %s315 = scalar_select %p314, %s20, 1
        %p316 = scmp.lt.s32.totalorder %s313, 1
        %s317 = scalar_select %p316, %s313, 1
        %s318 = smul.addr %s315, 2
        %s319 = sadd.s32 %s317, %s318
        %s320 = smul.addr %s319, 4
        %s321 = scalar_lea.vmem %s2, %s320
        %s322 = sadd.s32 %s21, 1
        %p323 = scmp.lt.s32.totalorder %s322, 0
        %s324 = scalar_select %p323, %s322, 0
        %s325 = smul.u32 2, %s324
      $region44: #{prenorm_forward.1} parent=31 // pred_fallthru
        _
    $region32: #{prenorm_forward.1} parent=5 // pred_fallthru
      _
    %p326 = scmp.le.s32.totalorder 1, %s13
    %p327 = scmp.lt.s32.totalorder %s13, 3
    %p328 = pnand %p326, %p327
    %p329 = pneg %p328
    // Predicated region
    $region45: #{prenorm_forward.1} parent=5 // pred_check
      _
    $region46: #{prenorm_forward.1} parent=5 // pred_check_branch
      %331 = sbr.rel (%p328) target = $region48
    $region47: #{prenorm_forward.1} parent=5 // pred_region
      %s332 = ssub.s32 %s13, 1
      %s333 = ssub.s32 %s23, 1
      %p334 = scmp.gt.s32.totalorder %s333, 0
      %s335 = scalar_select %p334, %s333, 0
      %s336 = smul.u32 2, %s335
      %p337 = scmp.lt.s32.totalorder %s22, 1
      %s338 = scalar_select %p337, %s22, 1
      %p339 = scmp.lt.s32.totalorder %s336, 1
      %s340 = scalar_select %p339, %s336, 1
      %s341 = smul.addr %s338, 2
      %s342 = sadd.s32 %s340, %s341
      %s343 = smul.addr %s342, 4
      %s344 = scalar_lea.vmem %s0, %s343
      %p345 = pneg %p59
      %p346 = pneg %p56
      %s347 = smul.u32 2, %s23
      %p348 = scmp.lt.s32.totalorder %s22, 1
      %s349 = scalar_select %p348, %s22, 1
      %p350 = scmp.lt.s32.totalorder %s347, 1
      %s351 = scalar_select %p350, %s347, 1
      %s352 = smul.addr %s349, 2
      %s353 = sadd.s32 %s351, %s352
      %s354 = smul.addr %s353, 4
      %s355 = scalar_lea.vmem %s1, %s354
      %p356 = pneg %p87
      %p357 = pneg %p84
      %s358 = sadd.s32 %s23, 1
      %p359 = scmp.lt.s32.totalorder %s358, 0
      %s360 = scalar_select %p359, %s358, 0
      %s361 = smul.u32 2, %s360
      %p362 = scmp.lt.s32.totalorder %s22, 1
      %s363 = scalar_select %p362, %s22, 1
      %p364 = scmp.lt.s32.totalorder %s361, 1
      %s365 = scalar_select %p364, %s361, 1
      %s366 = smul.addr %s363, 2
      %s367 = sadd.s32 %s365, %s366
      %s368 = smul.addr %s367, 4
      %s369 = scalar_lea.vmem %s2, %s368
      %p370 = pneg %p121
      %p371 = pneg %p118
      %p372 = pneg %p142
      %p373 = pneg %p139
      %p374 = pneg %p163
      %p375 = pneg %p160
      %s376 = smul.u32 2, %s23
      %p377 = scmp.lt.s32.totalorder %s376, 1
      %s378 = scalar_select %p377, %s376, 1
      %s379 = smul.addr %s378, 2
      %s380 = scalar_lea.vmem %s5, %s379
      %p381 = pneg %p189
      %p382 = pneg %p186
      %p383 = pneg %p210
      %p384 = pneg %p207
      %p385 = pneg %p238
      %p386 = pneg %p235
      %s387 = smul.u32 2, %s23
      %p388 = scmp.lt.s32.totalorder %s22, 1
      %s389 = scalar_select %p388, %s22, 1
      %p390 = scmp.lt.s32.totalorder %s387, 1
      %s391 = scalar_select %p390, %s387, 1
      %s392 = smul.addr %s389, 2
      %s393 = sadd.s32 %s391, %s392
      %s394 = smul.addr %s393, 4
      %s395 = scalar_lea.vmem %s7, %s394
      %s396 = ssub.s32 %s23, 1
      %p397 = scmp.gt.s32.totalorder %s396, 0
      %s398 = scalar_select %p397, %s396, 0
      %s399 = smul.u32 2, %s398
      %p400 = scmp.lt.s32.totalorder %s22, 1
      %s401 = scalar_select %p400, %s22, 1
      %p402 = scmp.lt.s32.totalorder %s399, 1
      %s403 = scalar_select %p402, %s399, 1
      %s404 = smul.addr %s401, 2
      %s405 = sadd.s32 %s403, %s404
      %s406 = smul.addr %s405, 4
      %s407 = scalar_lea.vmem %s0, %s406
      %s408 = ssub.s32 %s23, 1
      %p409 = scmp.gt.s32.totalorder %s408, 0
      %s410 = scalar_select %p409, %s408, 0
      %s411 = smul.u32 2, %s410
      %s412 = smul.u32 2, %s23
      %p413 = scmp.lt.s32.totalorder %s22, 1
      %s414 = scalar_select %p413, %s22, 1
      %p415 = scmp.lt.s32.totalorder %s412, 1
      %s416 = scalar_select %p415, %s412, 1
      %s417 = smul.addr %s414, 2
      %s418 = sadd.s32 %s416, %s417
      %s419 = smul.addr %s418, 4
      %s420 = scalar_lea.vmem %s1, %s419
      %s421 = smul.u32 2, %s23
      %s422 = sadd.s32 %s23, 1
      %p423 = scmp.lt.s32.totalorder %s422, 0
      %s424 = scalar_select %p423, %s422, 0
      %s425 = smul.u32 2, %s424
      %p426 = scmp.lt.s32.totalorder %s22, 1
      %s427 = scalar_select %p426, %s22, 1
      %p428 = scmp.lt.s32.totalorder %s425, 1
      %s429 = scalar_select %p428, %s425, 1
      %s430 = smul.addr %s427, 2
      %s431 = sadd.s32 %s429, %s430
      %s432 = smul.addr %s431, 4
      %s433 = scalar_lea.vmem %s2, %s432
      %s434 = sadd.s32 %s23, 1
      %p435 = scmp.lt.s32.totalorder %s434, 0
      %s436 = scalar_select %p435, %s434, 0
      %s437 = smul.u32 2, %s436
      %s438 = smul.u32 2, %s23
      %p439 = scmp.lt.s32.totalorder %s438, 1
      %s440 = scalar_select %p439, %s438, 1
      %s441 = smul.addr %s440, 2
      %s442 = scalar_lea.vmem %s5, %s441
      %s443 = smul.u32 2, %s23
      %s444 = smul.u32 2, %s23
      %p445 = scmp.lt.s32.totalorder %s22, 1
      %s446 = scalar_select %p445, %s22, 1
      %p447 = scmp.lt.s32.totalorder %s444, 1
      %s448 = scalar_select %p447, %s444, 1
      %s449 = smul.addr %s446, 2
      %s450 = sadd.s32 %s448, %s449
      %s451 = smul.addr %s450, 4
      %s452 = scalar_lea.vmem %s7, %s451
      %s453 = smul.u32 2, %s23
      %v454 = vld [vmem:[%s407 + $0x4] sm:$0xf]
      %v455 = vld [vmem:[%s420] sm:$0xff]
      %v456 = vld [vmem:[%s433] sm:$0xf]
      %458 = vrot.lane.b32.xlu0 %v454, 17
      %v459 = vpop.permute.xlu0 %458
      %v462 = vcombine.high %v455, %v455
      %463 = vrot.lane.b32.xlu0 %v455, 17
      %v464 = vpop.permute.xlu0 %463
      %465 = vrot.lane.b32.xlu0 %v462, 17
      %v466 = vpop.permute.xlu0 %465
      %vm467 = vcmask 138240
      %v468 = vsel %vm467, %v464, %v466
      %472 = vrot.lane.b32.xlu0 %v456, 17
      %v473 = vpop.permute.xlu0 %472
      %v475 = vsel %vm467, %v459, %v464
      %v476 = vsel %vm467, %v466, %v473
      %v477 = vld [vmem:[%s3] sm:$0xff]
      %vm478 = vcmask 31744
      %v480 = vsel %vm478, %v477, 0
      %vm482 = vcmask 1043456
      %v484 = vsel %vm482, %v475, 0
      %v486 = vsel %vm482, %v468, 0
      %v489 = vsel %vm482, %v476, 0
      %491 = vmatprep.subr.mxu0 %v486
      %492 = vmatpush1.msra.mxu0 %v484
      %493 = vmatprep.subr.mxu0 0.0
      %494 = vmatpush1.msra.mxu0 0.0
      %495 = vmatprep.subr.mxu0 0.0
      %496 = vmatpush1.msra.mxu0 0.0
      %497 = vmatprep.subr.mxu0 0.0
      %498 = vmatpush1.msra.mxu0 0.0
      %499 = vmatprep.subr.mxu0 0.0
      %500 = vmatpush1.msra.mxu0 0.0
      %501 = vmatprep.subr.mxu0 0.0
      %502 = vmatpush1.msra.mxu0 0.0
      %503 = vmatprep.subr.mxu0 0.0
      %504 = vmatpush1.msra.mxu0 0.0
      %505 = vmatprep.subr.mxu0 0.0
      %506 = vmatpush1.msra.mxu0 0.0
      %507 = vmatprep.subr.mxu0 0.0
      %508 = vmatpush1.msra.mxu0 0.0
      %509 = vmatprep.subr.mxu0 0.0
      %510 = vmatpush1.msra.mxu0 0.0
      %511 = vmatprep.subr.mxu0 0.0
      %512 = vmatpush1.msra.mxu0 0.0
      %513 = vmatprep.subr.mxu0 0.0
      %514 = vmatpush1.msra.mxu0 0.0
      %515 = vmatprep.subr.mxu0 0.0
      %516 = vmatpush1.msra.mxu0 0.0
      %517 = vmatprep.subr.mxu0 0.0
      %518 = vmatpush1.msra.mxu0 0.0
      %519 = vmatprep.subr.mxu0 0.0
      %520 = vmatpush1.msra.mxu0 0.0
      %521 = vmatprep.subr.mxu0 0.0
      %522 = vmatpush1.msra.mxu0 0.0
      %523 = vmatprep.subr.mxu0 0.0
      %524 = vmatpush1.msra.mxu0 0.0
      %525 = vmatprep.subr.mxu0 0.0
      %526 = vmatpush1.msra.mxu0 0.0
      %527 = vmatprep.subr.mxu0 0.0
      %528 = vmatpush1.msra.mxu0 0.0
      %529 = vmatprep.subr.mxu0 0.0
      %530 = vmatpush1.msra.mxu0 0.0
      %531 = vmatprep.subr.mxu0 0.0
      %532 = vmatpush1.msra.mxu0 0.0
      %533 = vmatprep.subr.mxu0 0.0
      %534 = vmatpush1.msra.mxu0 0.0
      %535 = vmatprep.subr.mxu0 0.0
      %536 = vmatpush1.msra.mxu0 0.0
      %537 = vmatprep.subr.mxu0 0.0
      %538 = vmatpush1.msra.mxu0 0.0
      %539 = vmatprep.subr.mxu0 0.0
      %540 = vmatpush1.msra.mxu0 0.0
      %541 = vmatprep.subr.mxu0 0.0
      %542 = vmatpush1.msra.mxu0 0.0
      %543 = vmatprep.subr.mxu0 0.0
      %544 = vmatpush1.msra.mxu0 0.0
      %545 = vmatprep.subr.mxu0 0.0
      %546 = vmatpush1.msra.mxu0 0.0
      %547 = vmatprep.subr.mxu0 0.0
      %548 = vmatpush1.msra.mxu0 0.0
      %549 = vmatprep.subr.mxu0 0.0
      %550 = vmatpush1.msra.mxu0 0.0
      %551 = vmatprep.subr.mxu0 0.0
      %552 = vmatpush1.msra.mxu0 0.0
      %553 = vmatprep.subr.mxu0 0.0
      %554 = vmatpush1.msra.mxu0 0.0
      %555 = vmatprep.mubr.f32.mxu0 0.0
      %556 = vmatmul.mubr.f32.gmra.mrb[0].mxu0 %v480
      %v557 = vpop.f32.mrb[0].mxu0
      %v558 = vadd.f32 0.0, %v557
      %v559 = vpop.f32.mrb[0].mxu0
      %v560 = vadd.f32 0.0, %v559
      %561 = vdwg.mxu0
      %562 = vmatprep.subr.mxu0 0.0
      %563 = vmatpush1.msra.mxu0 %v489
      %564 = vmatprep.subr.mxu0 0.0
      %565 = vmatpush1.msra.mxu0 0.0
      %566 = vmatprep.subr.mxu0 0.0
      %567 = vmatpush1.msra.mxu0 0.0
      %568 = vmatprep.subr.mxu0 0.0
      %569 = vmatpush1.msra.mxu0 0.0
      %570 = vmatprep.subr.mxu0 0.0
      %571 = vmatpush1.msra.mxu0 0.0
      %572 = vmatprep.subr.mxu0 0.0
      %573 = vmatpush1.msra.mxu0 0.0
      %574 = vmatprep.subr.mxu0 0.0
      %575 = vmatpush1.msra.mxu0 0.0
      %576 = vmatprep.subr.mxu0 0.0
      %577 = vmatpush1.msra.mxu0 0.0
      %578 = vmatprep.subr.mxu0 0.0
      %579 = vmatpush1.msra.mxu0 0.0
      %580 = vmatprep.subr.mxu0 0.0
      %581 = vmatpush1.msra.mxu0 0.0
      %582 = vmatprep.subr.mxu0 0.0
      %583 = vmatpush1.msra.mxu0 0.0
      %584 = vmatprep.subr.mxu0 0.0
      %585 = vmatpush1.msra.mxu0 0.0
      %586 = vmatprep.subr.mxu0 0.0
      %587 = vmatpush1.msra.mxu0 0.0
      %588 = vmatprep.subr.mxu0 0.0
      %589 = vmatpush1.msra.mxu0 0.0
      %590 = vmatprep.subr.mxu0 0.0
      %591 = vmatpush1.msra.mxu0 0.0
      %592 = vmatprep.subr.mxu0 0.0
      %593 = vmatpush1.msra.mxu0 0.0
      %594 = vmatprep.subr.mxu0 0.0
      %595 = vmatpush1.msra.mxu0 0.0
      %596 = vmatprep.subr.mxu0 0.0
      %597 = vmatpush1.msra.mxu0 0.0
      %598 = vmatprep.subr.mxu0 0.0
      %599 = vmatpush1.msra.mxu0 0.0
      %600 = vmatprep.subr.mxu0 0.0
      %601 = vmatpush1.msra.mxu0 0.0
      %602 = vmatprep.subr.mxu0 0.0
      %603 = vmatpush1.msra.mxu0 0.0
      %604 = vmatprep.subr.mxu0 0.0
      %605 = vmatpush1.msra.mxu0 0.0
      %606 = vmatprep.subr.mxu0 0.0
      %607 = vmatpush1.msra.mxu0 0.0
      %608 = vmatprep.subr.mxu0 0.0
      %609 = vmatpush1.msra.mxu0 0.0
      %610 = vmatprep.subr.mxu0 0.0
      %611 = vmatpush1.msra.mxu0 0.0
      %612 = vmatprep.subr.mxu0 0.0
      %613 = vmatpush1.msra.mxu0 0.0
      %614 = vmatprep.subr.mxu0 0.0
      %615 = vmatpush1.msra.mxu0 0.0
      %616 = vmatprep.subr.mxu0 0.0
      %617 = vmatpush1.msra.mxu0 0.0
      %618 = vmatprep.subr.mxu0 0.0
      %619 = vmatpush1.msra.mxu0 0.0
      %620 = vmatprep.subr.mxu0 0.0
      %621 = vmatpush1.msra.mxu0 0.0
      %622 = vmatprep.subr.mxu0 0.0
      %623 = vmatpush1.msra.mxu0 0.0
      %624 = vmatprep.subr.mxu0 0.0
      %625 = vmatpush1.msra.mxu0 0.0
      %626 = vmatprep.mubr.f32.mxu0 0.0
      %627 = vmatmul.mubr.f32.gmra.mrb[0].mxu0 %v480
      %v628 = vpop.f32.mrb[0].mxu0
      %v629 = vadd.f32 0.0, %v628
      %v630 = vpop.f32.mrb[0].mxu0
      %631 = vdwg.mxu0
      %v632 = vmul.f32 %v558, 0.70710677
      %v633 = vmul.f32 %v560, 0.70710677
      %v634 = vmul.f32 %v629, 0.70710677
      %v635 = vand.u32 2147483647, %v632
      %v636 = vand.u32 2147483647, %v633
      %v637 = vand.u32 2147483647, %v634
      %v638 = vmul.f32 %v635, 0.3275911
      %v639 = vmul.f32 %v636, 0.3275911
      %v640 = vmul.f32 %v637, 0.3275911
      %v641 = vadd.f32 %v638, 1.0
      %v642 = vadd.f32 %v639, 1.0
      %v643 = vadd.f32 %v640, 1.0
      %v644 = vrcp.pop %v641
      %v645 = vrcp.pop %v642
      %v646 = vrcp.pop %v643
      %v647 = vmul.f32 %v641, %v644
      %v648 = vmul.f32 %v642, %v645
      %v649 = vmul.f32 %v643, %v646
      %v650 = vsub.f32 2.0, %v647
      %v651 = vsub.f32 2.0, %v648
      %v652 = vsub.f32 2.0, %v649
      %v653 = vmul.f32 %v644, %v650
      %v654 = vmul.f32 %v645, %v651
      %v655 = vmul.f32 %v646, %v652
      %v656 = vmul.f32 %v653, 1.0614054
      %v657 = vmul.f32 %v654, 1.0614054
      %v658 = vmul.f32 %v655, 1.0614054
      %v659 = vadd.f32 %v656, -1.4531521
      %v660 = vadd.f32 %v657, -1.4531521
      %v661 = vadd.f32 %v658, -1.4531521
      %v662 = vmul.f32 %v659, %v653
      %v663 = vmul.f32 %v660, %v654
      %v664 = vmul.f32 %v661, %v655
      %v665 = vadd.f32 %v662, 1.4214138
      %v666 = vadd.f32 %v663, 1.4214138
      %v667 = vadd.f32 %v664, 1.4214138
      %v668 = vmul.f32 %v665, %v653
      %v669 = vmul.f32 %v666, %v654
      %v670 = vmul.f32 %v667, %v655
      %v671 = vadd.f32 %v668, -0.28449672
      %v672 = vadd.f32 %v669, -0.28449672
      %v673 = vadd.f32 %v670, -0.28449672
      %v674 = vmul.f32 %v671, %v653
      %v675 = vmul.f32 %v672, %v654
      %v676 = vmul.f32 %v673, %v655
      %v677 = vadd.f32 %v674, 0.2548296
      %v678 = vadd.f32 %v675, 0.2548296
      %v679 = vadd.f32 %v676, 0.2548296
      %v680 = vmul.f32 %v677, %v653
      %v681 = vmul.f32 %v678, %v654
      %v682 = vmul.f32 %v679, %v655
      %v683 = vsub.f32 0.0, %v635
      %v684 = vsub.f32 0.0, %v636
      %v685 = vsub.f32 0.0, %v637
      %v686 = vmul.f32 %v683, %v635
      %v687 = vmul.f32 %v684, %v636
      %v688 = vmul.f32 %v685, %v637
      %v689 = vmul.f32 %v686, 1.442695
      %v690 = vpow.pop %v689
      %v691 = vmul.f32 %v687, 1.442695
      %v692 = vpow.pop %v691
      %v693 = vmul.f32 %v688, 1.442695
      %v694 = vpow.pop %v693
      %v695 = vmul.f32 %v680, %v690
      %v696 = vmul.f32 %v681, %v692
      %v697 = vmul.f32 %v682, %v694
      %v698 = vsub.f32 1.0, %v695
      %v699 = vsub.f32 1.0, %v696
      %v700 = vsub.f32 1.0, %v697
      %vm701 = vcmp.lt.f32.partialorder %v632, 0.0
      %vm702 = vcmp.lt.f32.partialorder %v633, 0.0
      %vm703 = vcmp.lt.f32.partialorder %v634, 0.0
      %v704 = vsub.f32 0.0, %v698
      %v705 = vsub.f32 0.0, %v699
      %v706 = vsub.f32 0.0, %v700
      %v707 = vsel %vm701, %v704, %v698
      %v708 = vsel %vm702, %v705, %v699
      %v709 = vsel %vm703, %v706, %v700
      %v710 = vmul.f32 %v558, 0.5
      %v711 = vmul.f32 %v560, 0.5
      %v712 = vmul.f32 %v629, 0.5
      %v713 = vadd.f32 %v707, 1.0
      %v714 = vadd.f32 %v708, 1.0
      %v715 = vadd.f32 %v709, 1.0
      %v716 = vmul.f32 %v710, %v713
      %v717 = vmul.f32 %v711, %v714
      %v718 = vmul.f32 %v712, %v715
      %719 = vst [vmem:[#allocation2] sm:$0xff] %v716
      %720 = vst [vmem:[#allocation2 + $0x8] sm:$0xff] %v717
      %vm721 = vcmask 277504
      %722 = vst.msk [vmem:[#allocation2 + $0x10] sm:$0xff] %vm721, %v718
      %v723 = vld [vmem:[%s442] ss:$2 sm:$0x3]
      %s724 = scalar_lea.vmem %s442, 1
      %v725 = vld [vmem:[%s724] ss:$2 sm:$0x3]
      %vm726 = vcmp.gt.f32.partialorder %v723, 0.0
      %v727 = vsel %vm726, 1.0, 0.0
      %vm728 = vcmp.lt.f32.partialorder %v723, 15.0
      %v729 = vsel %vm728, 1.0, 0.0
      %vm730 = vcmp.gt.f32.partialorder %v725, 0.0
      %v731 = vsel %vm730, 1.0, 0.0
      %vm732 = vcmp.lt.f32.partialorder %v725, 15.0
      %v733 = vsel %vm732, 1.0, 0.0
      %v734 = vld [vmem:[%s4] sm:$0xff]
      %v735 = vld [vmem:[#allocation2] sm:$0xff]
      %v736 = vld [vmem:[#allocation2 + $0x8] sm:$0xff]
      %738 = vset.pattern.permute.xlu0 0
      %739 = vperm.xlu0 %738, %v734
      %v740 = vpop.permute.xlu0 %739
      %v742 = vmul.f32 %v740, %v735
      %v743 = vmul.f32 %v740, %v736
      %v744 = vmul.f32 %v727, %v731
      %v746 = vlaneseq
      %v747 = vshrl.u32 %v746, 7
      %v748 = vsub.s32 0, %v747
      %v749 = vrot.slane %v744, %v748
      %v750 = vlaneseq
      %v751 = vshrl.u32 %v750, 7
      %v752 = vsub.s32 1, %v751
      %v753 = vrot.slane %v744, %v752
      %v756 = vmul.f32 %v742, %v749
      %v757 = vmul.f32 %v743, %v753
      %v758 = vld [vmem:[#allocation2] sm:$0xff]
      %v759 = vld [vmem:[#allocation2 + $0x8] sm:$0xff]
      %v760 = vld [vmem:[#allocation2 + $0x10] sm:$0xff]
      %761 = vset.pattern.permute.xlu0 1
      %762 = vperm.xlu0 %761, %v734
      %v763 = vpop.permute.xlu0 %762
      %v765 = vmul.f32 %v763, %v758
      %v766 = vmul.f32 %v763, %v759
      %v767 = vmul.f32 %v763, %v760
      %v769 = vlaneseq
      %v770 = vshrl.u32 %v769, 7
      %v771 = vsub.s32 0, %v770
      %v772 = vrot.slane %v727, %v771
      %v773 = vlaneseq
      %v774 = vshrl.u32 %v773, 7
      %v775 = vsub.s32 1, %v774
      %v776 = vrot.slane %v727, %v775
      %777 = vrot.lane.b32.xlu0 %v772, 1
      %v778 = vpop.permute.xlu0 %777
      %779 = vrot.lane.b32.xlu0 %v776, 1
      %v780 = vpop.permute.xlu0 %779
      %vm781 = vcmask 7168
      %v782 = vsel %vm781, %v778, %v780
      %v786 = vmul.f32 %v765, %v778
      %v787 = vmul.f32 %v766, %v782
      %v788 = vmul.f32 %v767, %v780
      %792 = vrot.lane.b32.xlu0 %v786, 127
      %v793 = vpop.permute.xlu0 %792
      %794 = vrot.lane.b32.xlu0 %v787, 127
      %v795 = vpop.permute.xlu0 %794
      %796 = vrot.lane.b32.xlu0 %v788, 127
      %v797 = vpop.permute.xlu0 %796
      %vm798 = vcmask 1039360
      %v799 = vsel %vm798, %v793, %v795
      %v800 = vsel %vm798, %v795, %v797
      %v803 = vadd.f32 %v756, %v799
      %v804 = vadd.f32 %v757, %v800
      %805 = vset.pattern.permute.xlu0 2
      %806 = vperm.xlu0 %805, %v734
      %v807 = vpop.permute.xlu0 %806
      %v809 = vmul.f32 %v807, %v758
      %v810 = vmul.f32 %v807, %v759
      %v811 = vmul.f32 %v807, %v760
      %v812 = vmul.f32 %v727, %v733
      %v814 = vlaneseq
      %v815 = vshrl.u32 %v814, 7
      %v816 = vsub.s32 0, %v815
      %v817 = vrot.slane %v812, %v816
      %v818 = vlaneseq
      %v819 = vshrl.u32 %v818, 7
      %v820 = vsub.s32 1, %v819
      %v821 = vrot.slane %v812, %v820
      %822 = vrot.lane.b32.xlu0 %v817, 2
      %v823 = vpop.permute.xlu0 %822
      %824 = vrot.lane.b32.xlu0 %v821, 2
      %v825 = vpop.permute.xlu0 %824
      %vm826 = vcmask 15360
      %v827 = vsel %vm826, %v823, %v825
      %v831 = vmul.f32 %v809, %v823
      %v832 = vmul.f32 %v810, %v827
      %v833 = vmul.f32 %v811, %v825
      %837 = vrot.lane.b32.xlu0 %v831, 126
      %v838 = vpop.permute.xlu0 %837
      %839 = vrot.lane.b32.xlu0 %v832, 126
      %v840 = vpop.permute.xlu0 %839
      %841 = vrot.lane.b32.xlu0 %v833, 126
      %v842 = vpop.permute.xlu0 %841
      %vm843 = vcmask 1031168
      %v844 = vsel %vm843, %v838, %v840
      %v845 = vsel %vm843, %v840, %v842
      %v848 = vadd.f32 %v803, %v844
      %v849 = vadd.f32 %v804, %v845
      %850 = vset.pattern.permute.xlu0 3
      %851 = vperm.xlu0 %850, %v734
      %v852 = vpop.permute.xlu0 %851
      %v854 = vmul.f32 %v852, %v758
      %v855 = vmul.f32 %v852, %v759
      %v856 = vmul.f32 %v852, %v760
      %v858 = vlaneseq
      %v859 = vshrl.u32 %v858, 7
      %v860 = vsub.s32 0, %v859
      %v861 = vrot.slane %v731, %v860
      %v862 = vlaneseq
      %v863 = vshrl.u32 %v862, 7
      %v864 = vsub.s32 1, %v863
      %v865 = vrot.slane %v731, %v864
      %866 = vrot.lane.b32.xlu0 %v861, 16
      %v867 = vpop.permute.xlu0 %866
      %868 = vrot.lane.b32.xlu0 %v865, 16
      %v869 = vpop.permute.xlu0 %868
      %vm870 = vcmask 130048
      %v871 = vsel %vm870, %v867, %v869
      %v875 = vmul.f32 %v854, %v867
      %v876 = vmul.f32 %v855, %v871
      %v877 = vmul.f32 %v856, %v869
      %881 = vrot.lane.b32.xlu0 %v875, 112
      %v882 = vpop.permute.xlu0 %881
      %883 = vrot.lane.b32.xlu0 %v876, 112
      %v884 = vpop.permute.xlu0 %883
      %885 = vrot.lane.b32.xlu0 %v877, 112
      %v886 = vpop.permute.xlu0 %885
      %vm887 = vcmask 916480
      %v888 = vsel %vm887, %v882, %v884
      %v889 = vsel %vm887, %v884, %v886
      %v892 = vadd.f32 %v848, %v888
      %v893 = vadd.f32 %v849, %v889
      %894 = vset.pattern.permute.xlu0 4
      %895 = vperm.xlu0 %894, %v734
      %v896 = vpop.permute.xlu0 %895
      %v898 = vmul.f32 %v896, %v758
      %v899 = vmul.f32 %v896, %v759
      %v900 = vmul.f32 %v896, %v760
      %904 = vrot.lane.b32.xlu0 %v898, 111
      %v905 = vpop.permute.xlu0 %904
      %906 = vrot.lane.b32.xlu0 %v899, 111
      %v907 = vpop.permute.xlu0 %906
      %908 = vrot.lane.b32.xlu0 %v900, 111
      %v909 = vpop.permute.xlu0 %908
      %vm910 = vcmask 908288
      %v911 = vsel %vm910, %v905, %v907
      %v912 = vsel %vm910, %v907, %v909
      %v915 = vadd.f32 %v892, %v911
      %v916 = vadd.f32 %v893, %v912
      %917 = vset.pattern.permute.xlu0 5
      %918 = vperm.xlu0 %917, %v734
      %v919 = vpop.permute.xlu0 %918
      %v921 = vmul.f32 %v919, %v758
      %v922 = vmul.f32 %v919, %v759
      %v923 = vmul.f32 %v919, %v760
      %v925 = vlaneseq
      %v926 = vshrl.u32 %v925, 7
      %v927 = vsub.s32 0, %v926
      %v928 = vrot.slane %v733, %v927
      %v929 = vlaneseq
      %v930 = vshrl.u32 %v929, 7
      %v931 = vsub.s32 1, %v930
      %v932 = vrot.slane %v733, %v931
      %933 = vrot.lane.b32.xlu0 %v928, 18
      %v934 = vpop.permute.xlu0 %933
      %935 = vrot.lane.b32.xlu0 %v932, 18
      %v936 = vpop.permute.xlu0 %935
      %vm937 = vcmask 146432
      %v938 = vsel %vm937, %v934, %v936
      %v942 = vmul.f32 %v921, %v934
      %v943 = vmul.f32 %v922, %v938
      %v944 = vmul.f32 %v923, %v936
      %948 = vrot.lane.b32.xlu0 %v942, 110
      %v949 = vpop.permute.xlu0 %948
      %950 = vrot.lane.b32.xlu0 %v943, 110
      %v951 = vpop.permute.xlu0 %950
      %952 = vrot.lane.b32.xlu0 %v944, 110
      %v953 = vpop.permute.xlu0 %952
      %vm954 = vcmask 900096
      %v955 = vsel %vm954, %v949, %v951
      %v956 = vsel %vm954, %v951, %v953
      %v959 = vadd.f32 %v915, %v955
      %v960 = vadd.f32 %v916, %v956
      %961 = vset.pattern.permute.xlu0 6
      %962 = vperm.xlu0 %961, %v734
      %v963 = vpop.permute.xlu0 %962
      %v965 = vmul.f32 %v963, %v758
      %v966 = vmul.f32 %v963, %v759
      %v967 = vmul.f32 %v963, %v760
      %v968 = vmul.f32 %v729, %v731
      %v970 = vlaneseq
      %v971 = vshrl.u32 %v970, 7
      %v972 = vsub.s32 0, %v971
      %v973 = vrot.slane %v968, %v972
      %v974 = vlaneseq
      %v975 = vshrl.u32 %v974, 7
      %v976 = vsub.s32 1, %v975
      %v977 = vrot.slane %v968, %v976
      %978 = vrot.lane.b32.xlu0 %v973, 32
      %v979 = vpop.permute.xlu0 %978
      %980 = vrot.lane.b32.xlu0 %v977, 32
      %v981 = vpop.permute.xlu0 %980
      %vm982 = vcmask 261120
      %v983 = vsel %vm982, %v979, %v981
      %v987 = vmul.f32 %v965, %v979
      %v988 = vmul.f32 %v966, %v983
      %v989 = vmul.f32 %v967, %v981
      %993 = vrot.lane.b32.xlu0 %v987, 96
      %v994 = vpop.permute.xlu0 %993
      %995 = vrot.lane.b32.xlu0 %v988, 96
      %v996 = vpop.permute.xlu0 %995
      %997 = vrot.lane.b32.xlu0 %v989, 96
      %v998 = vpop.permute.xlu0 %997
      %vm999 = vcmask 785408
      %v1000 = vsel %vm999, %v994, %v996
      %v1001 = vsel %vm999, %v996, %v998
      %v1004 = vadd.f32 %v959, %v1000
      %v1005 = vadd.f32 %v960, %v1001
      %1006 = vset.pattern.permute.xlu0 7
      %1007 = vperm.xlu0 %1006, %v734
      %v1008 = vpop.permute.xlu0 %1007
      %v1010 = vmul.f32 %v1008, %v758
      %v1011 = vmul.f32 %v1008, %v759
      %v1012 = vmul.f32 %v1008, %v760
      %v1014 = vlaneseq
      %v1015 = vshrl.u32 %v1014, 7
      %v1016 = vsub.s32 0, %v1015
      %v1017 = vrot.slane %v729, %v1016
      %v1018 = vlaneseq
      %v1019 = vshrl.u32 %v1018, 7
      %v1020 = vsub.s32 1, %v1019
      %v1021 = vrot.slane %v729, %v1020
      %1022 = vrot.lane.b32.xlu0 %v1017, 33
      %v1023 = vpop.permute.xlu0 %1022
      %1024 = vrot.lane.b32.xlu0 %v1021, 33
      %v1025 = vpop.permute.xlu0 %1024
      %vm1026 = vcmask 269312
      %v1027 = vsel %vm1026, %v1023, %v1025
      %v1031 = vmul.f32 %v1010, %v1023
      %v1032 = vmul.f32 %v1011, %v1027
      %v1033 = vmul.f32 %v1012, %v1025
      %1037 = vrot.lane.b32.xlu0 %v1031, 95
      %v1038 = vpop.permute.xlu0 %1037
      %1039 = vrot.lane.b32.xlu0 %v1032, 95
      %v1040 = vpop.permute.xlu0 %1039
      %1041 = vrot.lane.b32.xlu0 %v1033, 95
      %v1042 = vpop.permute.xlu0 %1041
      %vm1043 = vcmask 777216
      %v1044 = vsel %vm1043, %v1038, %v1040
      %v1045 = vsel %vm1043, %v1040, %v1042
      %v1048 = vadd.f32 %v1004, %v1044
      %v1049 = vadd.f32 %v1005, %v1045
      %1050 = vset.pattern.permute.xlu0 8
      %1051 = vperm.xlu0 %1050, %v734
      %v1052 = vpop.permute.xlu0 %1051
      %v1054 = vmul.f32 %v1052, %v758
      %v1055 = vmul.f32 %v1052, %v759
      %v1056 = vmul.f32 %v1052, %v760
      %v1057 = vmul.f32 %v729, %v733
      %v1059 = vlaneseq
      %v1060 = vshrl.u32 %v1059, 7
      %v1061 = vsub.s32 0, %v1060
      %v1062 = vrot.slane %v1057, %v1061
      %v1063 = vlaneseq
      %v1064 = vshrl.u32 %v1063, 7
      %v1065 = vsub.s32 1, %v1064
      %v1066 = vrot.slane %v1057, %v1065
      %1067 = vrot.lane.b32.xlu0 %v1062, 34
      %v1068 = vpop.permute.xlu0 %1067
      %1069 = vrot.lane.b32.xlu0 %v1066, 34
      %v1070 = vpop.permute.xlu0 %1069
      %v1071 = vsel %vm721, %v1068, %v1070
      %v1075 = vmul.f32 %v1054, %v1068
      %v1076 = vmul.f32 %v1055, %v1071
      %v1077 = vmul.f32 %v1056, %v1070
      %1081 = vrot.lane.b32.xlu0 %v1075, 94
      %v1082 = vpop.permute.xlu0 %1081
      %1083 = vrot.lane.b32.xlu0 %v1076, 94
      %v1084 = vpop.permute.xlu0 %1083
      %1085 = vrot.lane.b32.xlu0 %v1077, 94
      %v1086 = vpop.permute.xlu0 %1085
      %vm1087 = vcmask 769024
      %v1088 = vsel %vm1087, %v1082, %v1084
      %v1089 = vsel %vm1087, %v1084, %v1086
      %v1092 = vadd.f32 %v1048, %v1088
      %v1093 = vadd.f32 %v1049, %v1089
      %v1094 = vmul.f32 %v1092, 0.70710677
      %v1095 = vmul.f32 %v1093, 0.70710677
      %v1096 = vand.u32 2147483647, %v1094
      %v1097 = vand.u32 2147483647, %v1095
      %v1098 = vmul.f32 %v1096, 0.3275911
      %v1099 = vmul.f32 %v1097, 0.3275911
      %v1100 = vadd.f32 %v1098, 1.0
      %v1101 = vadd.f32 %v1099, 1.0
      %v1102 = vrcp.pop %v1100
      %v1103 = vrcp.pop %v1101
      %v1104 = vmul.f32 %v1100, %v1102
      %v1105 = vmul.f32 %v1101, %v1103
      %v1106 = vsub.f32 2.0, %v1104
      %v1107 = vsub.f32 2.0, %v1105
      %v1108 = vmul.f32 %v1102, %v1106
      %v1109 = vmul.f32 %v1103, %v1107
      %v1110 = vmul.f32 %v1108, 1.0614054
      %v1111 = vmul.f32 %v1109, 1.0614054
      %v1112 = vadd.f32 %v1110, -1.4531521
      %v1113 = vadd.f32 %v1111, -1.4531521
      %v1114 = vmul.f32 %v1112, %v1108
      %v1115 = vmul.f32 %v1113, %v1109
      %v1116 = vadd.f32 %v1114, 1.4214138
      %v1117 = vadd.f32 %v1115, 1.4214138
      %v1118 = vmul.f32 %v1116, %v1108
      %v1119 = vmul.f32 %v1117, %v1109
      %v1120 = vadd.f32 %v1118, -0.28449672
      %v1121 = vadd.f32 %v1119, -0.28449672
      %v1122 = vmul.f32 %v1120, %v1108
      %v1123 = vmul.f32 %v1121, %v1109
      %v1124 = vadd.f32 %v1122, 0.2548296
      %v1125 = vadd.f32 %v1123, 0.2548296
      %v1126 = vmul.f32 %v1124, %v1108
      %v1127 = vmul.f32 %v1125, %v1109
      %v1128 = vsub.f32 0.0, %v1096
      %v1129 = vsub.f32 0.0, %v1097
      %v1130 = vmul.f32 %v1128, %v1096
      %v1131 = vmul.f32 %v1129, %v1097
      %v1132 = vmul.f32 %v1130, 1.442695
      %v1133 = vpow.pop %v1132
      %v1134 = vmul.f32 %v1131, 1.442695
      %v1135 = vpow.pop %v1134
      %v1136 = vmul.f32 %v1126, %v1133
      %v1137 = vmul.f32 %v1127, %v1135
      %v1138 = vsub.f32 1.0, %v1136
      %v1139 = vsub.f32 1.0, %v1137
      %vm1140 = vcmp.lt.f32.partialorder %v1094, 0.0
      %vm1141 = vcmp.lt.f32.partialorder %v1095, 0.0
      %v1142 = vsub.f32 0.0, %v1138
      %v1143 = vsub.f32 0.0, %v1139
      %v1144 = vsel %vm1140, %v1142, %v1138
      %v1145 = vsel %vm1141, %v1143, %v1139
      %v1146 = vmul.f32 %v1092, 0.5
      %v1147 = vmul.f32 %v1093, 0.5
      %v1148 = vadd.f32 %v1144, 1.0
      %v1149 = vadd.f32 %v1145, 1.0
      %v1150 = vmul.f32 %v1146, %v1148
      %v1151 = vmul.f32 %v1147, %v1149
      %v1152 = vld [vmem:[%s6] sm:$0xf]
      %vm1153 = vcmask 64512
      %v1155 = vsel %vm1153, %v1152, 0
      %1157 = vmatprep.subr.mxu0 %v1151
      %1158 = vmatpush1.msra.mxu0 %v1150
      %1159 = vmatprep.subr.mxu0 0.0
      %1160 = vmatpush1.msra.mxu0 0.0
      %1161 = vmatprep.subr.mxu0 0.0
      %1162 = vmatpush1.msra.mxu0 0.0
      %1163 = vmatprep.subr.mxu0 0.0
      %1164 = vmatpush1.msra.mxu0 0.0
      %1165 = vmatprep.subr.mxu0 0.0
      %1166 = vmatpush1.msra.mxu0 0.0
      %1167 = vmatprep.subr.mxu0 0.0
      %1168 = vmatpush1.msra.mxu0 0.0
      %1169 = vmatprep.subr.mxu0 0.0
      %1170 = vmatpush1.msra.mxu0 0.0
      %1171 = vmatprep.subr.mxu0 0.0
      %1172 = vmatpush1.msra.mxu0 0.0
      %1173 = vmatprep.subr.mxu0 0.0
      %1174 = vmatpush1.msra.mxu0 0.0
      %1175 = vmatprep.subr.mxu0 0.0
      %1176 = vmatpush1.msra.mxu0 0.0
      %1177 = vmatprep.subr.mxu0 0.0
      %1178 = vmatpush1.msra.mxu0 0.0
      %1179 = vmatprep.subr.mxu0 0.0
      %1180 = vmatpush1.msra.mxu0 0.0
      %1181 = vmatprep.subr.mxu0 0.0
      %1182 = vmatpush1.msra.mxu0 0.0
      %1183 = vmatprep.subr.mxu0 0.0
      %1184 = vmatpush1.msra.mxu0 0.0
      %1185 = vmatprep.subr.mxu0 0.0
      %1186 = vmatpush1.msra.mxu0 0.0
      %1187 = vmatprep.subr.mxu0 0.0
      %1188 = vmatpush1.msra.mxu0 0.0
      %1189 = vmatprep.subr.mxu0 0.0
      %1190 = vmatpush1.msra.mxu0 0.0
      %1191 = vmatprep.subr.mxu0 0.0
      %1192 = vmatpush1.msra.mxu0 0.0
      %1193 = vmatprep.subr.mxu0 0.0
      %1194 = vmatpush1.msra.mxu0 0.0
      %1195 = vmatprep.subr.mxu0 0.0
      %1196 = vmatpush1.msra.mxu0 0.0
      %1197 = vmatprep.subr.mxu0 0.0
      %1198 = vmatpush1.msra.mxu0 0.0
      %1199 = vmatprep.subr.mxu0 0.0
      %1200 = vmatpush1.msra.mxu0 0.0
      %1201 = vmatprep.subr.mxu0 0.0
      %1202 = vmatpush1.msra.mxu0 0.0
      %1203 = vmatprep.subr.mxu0 0.0
      %1204 = vmatpush1.msra.mxu0 0.0
      %1205 = vmatprep.subr.mxu0 0.0
      %1206 = vmatpush1.msra.mxu0 0.0
      %1207 = vmatprep.subr.mxu0 0.0
      %1208 = vmatpush1.msra.mxu0 0.0
      %1209 = vmatprep.subr.mxu0 0.0
      %1210 = vmatpush1.msra.mxu0 0.0
      %1211 = vmatprep.subr.mxu0 0.0
      %1212 = vmatpush1.msra.mxu0 0.0
      %1213 = vmatprep.subr.mxu0 0.0
      %1214 = vmatpush1.msra.mxu0 0.0
      %1215 = vmatprep.subr.mxu0 0.0
      %1216 = vmatpush1.msra.mxu0 0.0
      %1217 = vmatprep.subr.mxu0 0.0
      %1218 = vmatpush1.msra.mxu0 0.0
      %1219 = vmatprep.subr.mxu0 0.0
      %1220 = vmatpush1.msra.mxu0 0.0
      %1221 = vmatprep.mubr.f32.mxu0 0.0
      %1222 = vmatmul.mubr.f32.gmra.mrb[0].mxu0 %v1155
      %v1223 = vpop.f32.mrb[0].mxu0
      %v1224 = vadd.f32 0.0, %v1223
      %v1225 = vpop.f32.mrb[0].mxu0
      %v1226 = vadd.f32 0.0, %v1225
      %1227 = vdwg.mxu0
      %v1230 = vcombine.low %v1224, %v1226
      %1232 = vst [vmem:[%s452] sm:$0xff] %v1230
      %s1233 = smul.u32 2, %s23
      %p1234 = scmp.lt.s32.totalorder %s22, 1
      %s1235 = scalar_select %p1234, %s22, 1
      %p1236 = scmp.lt.s32.totalorder %s1233, 1
      %s1237 = scalar_select %p1236, %s1233, 1
      %s1238 = smul.addr %s1235, 2
      %s1239 = sadd.s32 %s1237, %s1238
      %s1240 = smul.addr %s1239, 4
      %s1241 = scalar_lea.vmem %s7, %s1240
      // Predicated region
      $region49: #{prenorm_forward.1} parent=47 // pred_check
        %p1242 = pneg %p235
      $region50: #{prenorm_forward.1} parent=47 // pred_check_branch
        %1244 = sbr.rel (%p1242) target = $region52
      $region51: #{prenorm_forward.1} parent=47 // pred_region
        %s1245 = smul.u32 2, %s23
      $region52: #{prenorm_forward.1} parent=47 // pred_fallthru
        _
    $region48: #{prenorm_forward.1} parent=5 // pred_fallthru
      _
    %p1246 = scmp.le.s32.totalorder 2, %s13
    // Predicated region
    $region53: #{prenorm_forward.1} parent=5 // pred_check
      %p1247 = pneg %p1246
    $region54: #{prenorm_forward.1} parent=5 // pred_check_branch
      %1249 = sbr.rel (%p1247) target = $region56
    $region55: #{prenorm_forward.1} parent=5 // pred_region
      %s1250 = ssub.s32 %s13, 2
      // Predicated region
      $region57: #{prenorm_forward.1} parent=55 // pred_check
        %p1251 = pneg %p241
      $region58: #{prenorm_forward.1} parent=55 // pred_check_branch
        %1253 = sbr.rel (%p1251) target = $region60
      $region59: #{prenorm_forward.1} parent=55 // pred_region
        %s1254 = smul.u32 2, %s25
        %p1255 = scmp.lt.s32.totalorder %s24, 1
        %s1256 = scalar_select %p1255, %s24, 1
        %p1257 = scmp.lt.s32.totalorder %s1254, 1
        %s1258 = scalar_select %p1257, %s1254, 1
        %s1259 = smul.addr %s1256, 2
        %s1260 = sadd.s32 %s1258, %s1259
        %s1261 = smul.addr %s1260, 4
        %s1262 = scalar_lea.vmem %s7, %s1261
      $region60: #{prenorm_forward.1} parent=55 // pred_fallthru
        _
    $region56: #{prenorm_forward.1} parent=5 // pred_fallthru
      _
  $region6: #{prenorm_forward.1} parent=0 // loop_footer
    %s17 = sadd.s32 1, %s13
  $region7: #{prenorm_forward.1} parent=0 // loop_footer_branch
    %12 = sbr.rel target = $region3
  $region8: #{prenorm_forward.1} parent=0 // loop_exit
    _

</llo_original>
